<compile_context>
chip_gen: v7x
topology: tpu7x:2x2x1
jax: 0.10.0
libtpu: 0.0.40
codegen_flags: <defaults>
</compile_context>

<pallas_src>
import math
from functools import partial

import jax
import jax.numpy as jnp
from jax import lax
from jax.experimental import pallas as pl
from jax.experimental.pallas import tpu as pltpu  # noqa: F401  (kept for TPU-specific tuning hooks)

# ---- model dims (small, consistent with a T5-v1.1 encoder) ----
D_MODEL = 32
N_HEADS = 4
HEAD_DIM = 8           # inner dim = N_HEADS * HEAD_DIM = 32
D_FF = 64
N_LAYERS = 2
VOCAB = 128
REL_BUCKETS = 32
REL_MAX_DIST = 128
LN_EPS = 1e-6
INNER = N_HEADS * HEAD_DIM


# ---------------- Pallas kernels ----------------

def _t5_layer_kernel(h_ref, ln1_ref, wqkv_ref, wo_ref,
                     ln2_ref, wi_ref, wo_ff_ref, bias_ref, o_ref):
    """One full T5 encoder layer, fully fused, single grid step.

    h_ref:     (B, S, D)      hidden states (residual stream)
    ln1_ref:   (1, 1, D)      attention RMSNorm weight
    wqkv_ref:  (D, 3*inner)   fused Q/K/V projection
    wo_ref:    (inner, D)     attention output projection
    ln2_ref:   (1, 1, D)      FF RMSNorm weight
    wi_ref:    (D, 2*F)       fused gated-GELU input projections (wi_0 | wi_1)
    wo_ff_ref: (F, D)         FF output projection
    bias_ref:  (H, S, S)      relative position bias (shared across batch)
    o_ref:     (B, S, D)      new hidden states
    """
    B, S, D = h_ref.shape
    H = bias_ref.shape[0]
    inner = wo_ref.shape[0]
    Dh = inner // H
    F = wo_ff_ref.shape[0]

    x = h_ref[...].astype(jnp.float32)                                 # (B, S, D)

    # ---- self-attention block: RMSNorm -> fused QKV -> per-head attn -> Wo -> residual
    var = jnp.mean(x * x, axis=-1, keepdims=True)
    normed = (x * lax.rsqrt(var + LN_EPS)) * ln1_ref[...]              # (B, S, D)
    qkv = jnp.dot(normed.reshape(B * S, D), wqkv_ref[...],
                  preferred_element_type=jnp.float32)                  # (B*S, 3*inner)
    qkv = qkv.reshape(B, S, 3 * inner)
    q = qkv[:, :, :inner]
    k = qkv[:, :, inner:2 * inner]
    v = qkv[:, :, 2 * inner:]

    ctx_heads = []
    for h in range(H):                                                 # static unroll, H=4
        qh = q[:, :, h * Dh:(h + 1) * Dh]                              # (B, S, Dh)
        kh = k[:, :, h * Dh:(h + 1) * Dh]
        vh = v[:, :, h * Dh:(h + 1) * Dh]
        # T5 attention has no 1/sqrt(d) scaling.
        s = jnp.einsum('bqd,bkd->bqk', qh, kh,
                       preferred_element_type=jnp.float32)             # (B, S, S)
        s = s + bias_ref[h][None]                                      # broadcast over batch
        s = s - jnp.max(s, axis=-1, keepdims=True)
        p = jnp.exp(s)
        p = p * pl.reciprocal(jnp.sum(p, axis=-1, keepdims=True), approx=True)
        ctx_heads.append(jnp.einsum('bqk,bkd->bqd', p, vh,
                                    preferred_element_type=jnp.float32))
    ctx = jnp.concatenate(ctx_heads, axis=-1)                          # (B, S, inner)
    attn = jnp.dot(ctx.reshape(B * S, inner), wo_ref[...],
                   preferred_element_type=jnp.float32).reshape(B, S, D)
    x = x + attn                                                       # fused residual add

    # ---- feed-forward block: RMSNorm -> fused gated-GELU FF -> residual
    var2 = jnp.mean(x * x, axis=-1, keepdims=True)
    normed2 = ((x * lax.rsqrt(var2 + LN_EPS)) * ln2_ref[...]).reshape(B * S, D)
    hw = jnp.dot(normed2, wi_ref[...],
                 preferred_element_type=jnp.float32)                   # (B*S, 2*F) lane-dense
    h0 = hw[:, :F]
    h1 = hw[:, F:]
    g = 0.5 * h0 * (1.0 + jnp.tanh(0.7978845608028654 *
                                   (h0 + 0.044715 * h0 * h0 * h0)))    # gelu(tanh approx)
    ff = jnp.dot(g * h1, wo_ff_ref[...],
                 preferred_element_type=jnp.float32).reshape(B, S, D)
    o_ref[...] = (x + ff).astype(o_ref.dtype)


def _final_rmsnorm_kernel(x_ref, w_ref, o_ref):
    # T5LayerNorm: no mean subtraction, no bias.
    x = x_ref[...].astype(jnp.float32)
    var = jnp.mean(x * x, axis=-1, keepdims=True)
    o_ref[...] = (x * lax.rsqrt(var + LN_EPS) * w_ref[...]).astype(o_ref.dtype)


# ---------------- pallas_call wrappers (single grid step: everything fits in VMEM) ----------------

def t5_layer(hidden, lyr, pos_bias):
    B, S, D = hidden.shape
    return pl.pallas_call(
        _t5_layer_kernel,
        out_shape=jax.ShapeDtypeStruct((B, S, D), hidden.dtype),
    )(hidden, lyr["ln1"], lyr["wqkv"], lyr["wo"],
      lyr["ln2"], lyr["wi"], lyr["wo_ff"], pos_bias)


def final_rmsnorm(hidden, w):
    B, S, D = hidden.shape
    return pl.pallas_call(
        _final_rmsnorm_kernel,
        out_shape=jax.ShapeDtypeStruct((B, S, D), hidden.dtype),
    )(hidden, w)


# ---------------- T5 encoder glue ----------------

def t5_relative_position_bucket(rel_pos, num_buckets=REL_BUCKETS, max_distance=REL_MAX_DIST):
    # bidirectional bucketing, as in HF T5Attention._relative_position_bucket
    num_buckets //= 2
    buckets = (rel_pos > 0).astype(jnp.int32) * num_buckets
    n = jnp.abs(rel_pos)
    max_exact = num_buckets // 2
    is_small = n < max_exact
    n_f = jnp.maximum(n, 1).astype(jnp.float32)
    val_if_large = max_exact + (
        jnp.log(n_f / max_exact) / math.log(max_distance / max_exact)
        * (num_buckets - max_exact)
    ).astype(jnp.int32)
    val_if_large = jnp.minimum(val_if_large, num_buckets - 1)
    return buckets + jnp.where(is_small, n, val_if_large)


def compute_position_bias(rel_emb, S):
    # TODO(synk): bucket-table gather stays in JAX glue (tiny, data-dependent gather).
    ctx = jnp.arange(S)[:, None]
    mem = jnp.arange(S)[None, :]
    buckets = t5_relative_position_bucket(mem - ctx)      # (S, S)
    bias = rel_emb[buckets]                               # (S, S, H)
    return jnp.transpose(bias, (2, 0, 1))                 # (H, S, S) -- never broadcast to B*H


def init_params(key):
    def nrm(k, shape, scale=0.02):
        return scale * jax.random.normal(k, shape, jnp.float32)

    keys = jax.random.split(key, 2 + 5 * N_LAYERS)
    it = iter(keys)
    params = {
        "embed": nrm(next(it), (VOCAB, D_MODEL), 1.0),
        "rel_bias": nrm(next(it), (REL_BUCKETS, N_HEADS)),
        "final_ln": jnp.ones((1, 1, D_MODEL), jnp.float32),
        "layers": [],
    }
    for _ in range(N_LAYERS):
        params["layers"].append(dict(
            ln1=jnp.ones((1, 1, D_MODEL), jnp.float32),
            wqkv=nrm(next(it), (D_MODEL, 3 * INNER)),       # fused Q|K|V
            wo=nrm(next(it), (INNER, D_MODEL)),
            ln2=jnp.ones((1, 1, D_MODEL), jnp.float32),
            wi=nrm(next(it), (D_MODEL, 2 * D_FF)),          # fused wi_0|wi_1 (lane-dense 128)
            wo_ff=nrm(next(it), (D_FF, D_MODEL)),
        ))
    return params


def encoder_forward(params, input_ids):
    # TODO(synk): embedding lookup (gather) stays in JAX glue.
    # TODO(synk): no attention mask, matching `self.encoder(emb)` called without one.
    B, S = input_ids.shape
    hidden = params["embed"][input_ids]                          # (B, S, D)
    pos_bias = compute_position_bias(params["rel_bias"], S)      # (H, S, S)

    for lyr in params["layers"]:
        hidden = t5_layer(hidden, lyr, pos_bias)                 # one fused pallas_call per layer

    return final_rmsnorm(hidden, params["final_ln"])             # (B, S, D)


def neuron_flux_t5_text_encoder_forward(params, emb, output_hidden_states=False):
    # equivalent to: torch.unsqueeze(self.encoder(emb)['last_hidden_state'], 1)
    # TODO(synk): output_hidden_states is accepted but unused, matching the wrapper's forward.
    last_hidden = encoder_forward(params, emb)        # (B, S, D)
    return last_hidden[:, None, :, :]                 # (B, 1, S, D)


if __name__ == "__main__":
    key = jax.random.PRNGKey(0)
    pkey, ikey = jax.random.split(key)
    params = init_params(pkey)

    B, S = 2, 8
    emb = jax.random.randint(ikey, (B, S), 0, VOCAB, dtype=jnp.int32)

    fwd = jax.jit(partial(neuron_flux_t5_text_encoder_forward, params))
    out = fwd(emb)
    out = jax.block_until_ready(out)

    assert out.shape == (B, 1, S, D_MODEL), out.shape
    assert out.dtype == jnp.float32
    assert bool(jnp.all(jnp.isfinite(out)))
    print("KERNEL_OK")
</pallas_src>

<mosaic_0001>
module attributes {stable_mosaic.version = 11 : i64} {
  func.func @_final_rmsnorm_kernel(%arg0: memref<2x8x32xf32, #tpu.memory_space<vmem>>, %arg1: memref<1x1x32xf32, #tpu.memory_space<vmem>>, %arg2: memref<2x8x32xf32, #tpu.memory_space<vmem>>) attributes {dimension_semantics = [], scalar_prefetch = 0 : i64, scratch_operands = 0 : i64, tpu.core_type = #tpu.core_type<tc>} {
    %c0 = arith.constant 0 : index
    %c0_0 = arith.constant 0 : index
    %c0_1 = arith.constant 0 : index
    %0 = vector.load %arg0[%c0, %c0_0, %c0_1] : memref<2x8x32xf32, #tpu.memory_space<vmem>>, vector<2x8x32xf32>
    %1 = arith.mulf %0, %0 : vector<2x8x32xf32>
    %cst = arith.constant dense<0.000000e+00> : vector<2x8xf32>
    %2 = vector.multi_reduction <add>, %1, %cst [2] : vector<2x8x32xf32> to vector<2x8xf32>
    %3 = vector.shape_cast %2 : vector<2x8xf32> to vector<2x8x1xf32>
    %cst_2 = arith.constant 3.200000e+01 : f32
    %4 = vector.broadcast %cst_2 : f32 to vector<2x8x1xf32>
    %5 = arith.divf %3, %4 : vector<2x8x1xf32>
    %cst_3 = arith.constant 9.99999997E-7 : f32
    %6 = vector.broadcast %cst_3 : f32 to vector<2x8x1xf32>
    %7 = arith.addf %5, %6 : vector<2x8x1xf32>
    %8 = math.rsqrt %7 : vector<2x8x1xf32>
    %9 = vector.broadcast %8 : vector<2x8x1xf32> to vector<2x8x32xf32>
    %10 = arith.mulf %0, %9 : vector<2x8x32xf32>
    %c0_4 = arith.constant 0 : index
    %c0_5 = arith.constant 0 : index
    %c0_6 = arith.constant 0 : index
    %11 = vector.load %arg1[%c0_4, %c0_5, %c0_6] : memref<1x1x32xf32, #tpu.memory_space<vmem>>, vector<1x1x32xf32>
    %12 = vector.broadcast %11 : vector<1x1x32xf32> to vector<2x8x32xf32>
    %13 = arith.mulf %10, %12 : vector<2x8x32xf32>
    %c0_7 = arith.constant 0 : index
    %c0_8 = arith.constant 0 : index
    %c0_9 = arith.constant 0 : index
    %14 = vector.load %arg2[%c0_7, %c0_8, %c0_9] : memref<2x8x32xf32, #tpu.memory_space<vmem>>, vector<2x8x32xf32>
    tpu.vector_store %arg2[%c0_7, %c0_8, %c0_9], %13 {strides = array<i32>} : memref<2x8x32xf32, #tpu.memory_space<vmem>>, vector<2x8x32xf32>,
    return
  }
}

module attributes {stable_mosaic.version = 11 : i64} {
  func.func @_t5_layer_kernel(%arg0: memref<2x8x32xf32, #tpu.memory_space<vmem>>, %arg1: memref<1x1x32xf32, #tpu.memory_space<vmem>>, %arg2: memref<32x96xf32, #tpu.memory_space<vmem>>, %arg3: memref<32x32xf32, #tpu.memory_space<vmem>>, %arg4: memref<1x1x32xf32, #tpu.memory_space<vmem>>, %arg5: memref<32x128xf32, #tpu.memory_space<vmem>>, %arg6: memref<64x32xf32, #tpu.memory_space<vmem>>, %arg7: memref<4x8x8xf32, #tpu.memory_space<vmem>>, %arg8: memref<2x8x32xf32, #tpu.memory_space<vmem>>) attributes {dimension_semantics = [], scalar_prefetch = 0 : i64, scratch_operands = 0 : i64, tpu.core_type = #tpu.core_type<tc>} {
    %c0 = arith.constant 0 : index
    %c0_0 = arith.constant 0 : index
    %c0_1 = arith.constant 0 : index
    %0 = vector.load %arg0[%c0, %c0_0, %c0_1] : memref<2x8x32xf32, #tpu.memory_space<vmem>>, vector<2x8x32xf32>
    %1 = arith.mulf %0, %0 : vector<2x8x32xf32>
    %cst = arith.constant dense<0.000000e+00> : vector<2x8xf32>
    %2 = vector.multi_reduction <add>, %1, %cst [2] : vector<2x8x32xf32> to vector<2x8xf32>
    %3 = vector.shape_cast %2 : vector<2x8xf32> to vector<2x8x1xf32>
    %cst_2 = arith.constant 3.200000e+01 : f32
    %4 = vector.broadcast %cst_2 : f32 to vector<2x8x1xf32>
    %5 = arith.divf %3, %4 : vector<2x8x1xf32>
    %cst_3 = arith.constant 9.99999997E-7 : f32
    %6 = vector.broadcast %cst_3 : f32 to vector<2x8x1xf32>
    %7 = arith.addf %5, %6 : vector<2x8x1xf32>
    %8 = math.rsqrt %7 : vector<2x8x1xf32>
    %9 = vector.broadcast %8 : vector<2x8x1xf32> to vector<2x8x32xf32>
    %10 = arith.mulf %0, %9 : vector<2x8x32xf32>
    %c0_4 = arith.constant 0 : index
    %c0_5 = arith.constant 0 : index
    %c0_6 = arith.constant 0 : index
    %11 = vector.load %arg1[%c0_4, %c0_5, %c0_6] : memref<1x1x32xf32, #tpu.memory_space<vmem>>, vector<1x1x32xf32>
    %12 = vector.broadcast %11 : vector<1x1x32xf32> to vector<2x8x32xf32>
    %13 = arith.mulf %10, %12 : vector<2x8x32xf32>
    %14 = vector.shape_cast %13 : vector<2x8x32xf32> to vector<16x32xf32>
    %c0_7 = arith.constant 0 : index
    %c0_8 = arith.constant 0 : index
    %15 = vector.load %arg2[%c0_7, %c0_8] : memref<32x96xf32, #tpu.memory_space<vmem>>, vector<32x96xf32>
    %cst_9 = arith.constant dense<0.000000e+00> : vector<16x96xf32>
    %16 = tpu.matmul %14, %15, %cst_9 {dimension_numbers = #tpu.dot_dimension_numbers<[1], [0], [0], [1], [0, 0, 1, 1], [], []>} : vector<16x32xf32>, vector<32x96xf32>, vector<16x96xf32> -> vector<16x96xf32>
    %17 = vector.shape_cast %16 : vector<16x96xf32> to vector<2x8x96xf32>
    %18 = vector.extract_strided_slice %17 {offsets = [0, 0, 0], sizes = [2, 8, 32], strides = [1, 1, 1]} : vector<2x8x96xf32> to vector<2x8x32xf32>
    %19 = vector.extract_strided_slice %17 {offsets = [0, 0, 32], sizes = [2, 8, 32], strides = [1, 1, 1]} : vector<2x8x96xf32> to vector<2x8x32xf32>
    %20 = vector.extract_strided_slice %17 {offsets = [0, 0, 64], sizes = [2, 8, 32], strides = [1, 1, 1]} : vector<2x8x96xf32> to vector<2x8x32xf32>
    %21 = vector.extract_strided_slice %18 {offsets = [0, 0, 0], sizes = [2, 8, 8], strides = [1, 1, 1]} : vector<2x8x32xf32> to vector<2x8x8xf32>
    %22 = vector.extract_strided_slice %19 {offsets = [0, 0, 0], sizes = [2, 8, 8], strides = [1, 1, 1]} : vector<2x8x32xf32> to vector<2x8x8xf32>
    %23 = vector.extract_strided_slice %20 {offsets = [0, 0, 0], sizes = [2, 8, 8], strides = [1, 1, 1]} : vector<2x8x32xf32> to vector<2x8x8xf32>
    "tpu.trace_start"() <{level = 10 : i32, message = "bqd,bkd->bqk"}> : () -> ()
    %cst_10 = arith.constant dense<0.000000e+00> : vector<2x8x8xf32>
    %24 = tpu.matmul %21, %22, %cst_10 {dimension_numbers = #tpu.dot_dimension_numbers<[2], [2], [1], [1], [0, 0, 0, 1, 1, 1], [0], [0]>} : vector<2x8x8xf32>, vector<2x8x8xf32>, vector<2x8x8xf32> -> vector<2x8x8xf32>
    "tpu.trace_stop"() : () -> ()
    %c0_11 = arith.constant 0 : index
    %c0_12 = arith.constant 0 : index
    %c0_13 = arith.constant 0 : index
    %25 = vector.load %arg7[%c0_11, %c0_12, %c0_13] : memref<4x8x8xf32, #tpu.memory_space<vmem>>, vector<1x8x8xf32>
    %26 = vector.shape_cast %25 : vector<1x8x8xf32> to vector<8x8xf32>
    %27 = vector.shape_cast %26 : vector<8x8xf32> to vector<1x8x8xf32>
    %28 = vector.broadcast %27 : vector<1x8x8xf32> to vector<2x8x8xf32>
    %29 = arith.addf %24, %28 : vector<2x8x8xf32>
    %cst_14 = arith.constant dense<0xFF800000> : vector<2x8xf32>
    %30 = vector.multi_reduction <maximumf>, %29, %cst_14 [2] : vector<2x8x8xf32> to vector<2x8xf32>
    %31 = vector.shape_cast %30 : vector<2x8xf32> to vector<2x8x1xf32>
    %32 = vector.broadcast %31 : vector<2x8x1xf32> to vector<2x8x8xf32>
    %33 = arith.subf %29, %32 : vector<2x8x8xf32>
    %34 = math.exp %33 : vector<2x8x8xf32>
    %cst_15 = arith.constant dense<0.000000e+00> : vector<2x8xf32>
    %35 = vector.multi_reduction <add>, %34, %cst_15 [2] : vector<2x8x8xf32> to vector<2x8xf32>
    %36 = vector.shape_cast %35 : vector<2x8xf32> to vector<2x8x1xf32>
    %37 = tpu.reciprocal %36 {approx = true} : vector<2x8x1xf32> -> vector<2x8x1xf32>
    %38 = vector.broadcast %37 : vector<2x8x1xf32> to vector<2x8x8xf32>
    %39 = arith.mulf %34, %38 : vector<2x8x8xf32>
    "tpu.trace_start"() <{level = 10 : i32, message = "bqk,bkd->bqd"}> : () -> ()
    %cst_16 = arith.constant dense<0.000000e+00> : vector<2x8x8xf32>
    %40 = tpu.matmul %39, %23, %cst_16 {dimension_numbers = #tpu.dot_dimension_numbers<[2], [1], [1], [2], [0, 0, 0, 1, 1, 2], [0], [0]>} : vector<2x8x8xf32>, vector<2x8x8xf32>, vector<2x8x8xf32> -> vector<2x8x8xf32>
    "tpu.trace_stop"() : () -> ()
    %41 = vector.extract_strided_slice %18 {offsets = [0, 0, 8], sizes = [2, 8, 8], strides = [1, 1, 1]} : vector<2x8x32xf32> to vector<2x8x8xf32>
    %42 = vector.extract_strided_slice %19 {offsets = [0, 0, 8], sizes = [2, 8, 8], strides = [1, 1, 1]} : vector<2x8x32xf32> to vector<2x8x8xf32>
    %43 = vector.extract_strided_slice %20 {offsets = [0, 0, 8], sizes = [2, 8, 8], strides = [1, 1, 1]} : vector<2x8x32xf32> to vector<2x8x8xf32>
    "tpu.trace_start"() <{level = 10 : i32, message = "bqd,bkd->bqk"}> : () -> ()
    %cst_17 = arith.constant dense<0.000000e+00> : vector<2x8x8xf32>
    %44 = tpu.matmul %41, %42, %cst_17 {dimension_numbers = #tpu.dot_dimension_numbers<[2], [2], [1], [1], [0, 0, 0, 1, 1, 1], [0], [0]>} : vector<2x8x8xf32>, vector<2x8x8xf32>, vector<2x8x8xf32> -> vector<2x8x8xf32>
    "tpu.trace_stop"() : () -> ()
    %c1 = arith.constant 1 : index
    %c0_18 = arith.constant 0 : index
    %c0_19 = arith.constant 0 : index
    %45 = vector.load %arg7[%c1, %c0_18, %c0_19] : memref<4x8x8xf32, #tpu.memory_space<vmem>>, vector<1x8x8xf32>
    %46 = vector.shape_cast %45 : vector<1x8x8xf32> to vector<8x8xf32>
    %47 = vector.shape_cast %46 : vector<8x8xf32> to vector<1x8x8xf32>
    %48 = vector.broadcast %47 : vector<1x8x8xf32> to vector<2x8x8xf32>
    %49 = arith.addf %44, %48 : vector<2x8x8xf32>
    %cst_20 = arith.constant dense<0xFF800000> : vector<2x8xf32>
    %50 = vector.multi_reduction <maximumf>, %49, %cst_20 [2] : vector<2x8x8xf32> to vector<2x8xf32>
    %51 = vector.shape_cast %50 : vector<2x8xf32> to vector<2x8x1xf32>
    %52 = vector.broadcast %51 : vector<2x8x1xf32> to vector<2x8x8xf32>
    %53 = arith.subf %49, %52 : vector<2x8x8xf32>
    %54 = math.exp %53 : vector<2x8x8xf32>
    %cst_21 = arith.constant dense<0.000000e+00> : vector<2x8xf32>
    %55 = vector.multi_reduction <add>, %54, %cst_21 [2] : vector<2x8x8xf32> to vector<2x8xf32>
    %56 = vector.shape_cast %55 : vector<2x8xf32> to vector<2x8x1xf32>
    %57 = tpu.reciprocal %56 {approx = true} : vector<2x8x1xf32> -> vector<2x8x1xf32>
    %58 = vector.broadcast %57 : vector<2x8x1xf32> to vector<2x8x8xf32>
    %59 = arith.mulf %54, %58 : vector<2x8x8xf32>
    "tpu.trace_start"() <{level = 10 : i32, message = "bqk,bkd->bqd"}> : () -> ()
    %cst_22 = arith.constant dense<0.000000e+00> : vector<2x8x8xf32>
    %60 = tpu.matmul %59, %43, %cst_22 {dimension_numbers = #tpu.dot_dimension_numbers<[2], [1], [1], [2], [0, 0, 0, 1, 1, 2], [0], [0]>} : vector<2x8x8xf32>, vector<2x8x8xf32>, vector<2x8x8xf32> -> vector<2x8x8xf32>
    "tpu.trace_stop"() : () -> ()
    %61 = vector.extract_strided_slice %18 {offsets = [0, 0, 16], sizes = [2, 8, 8], strides = [1, 1, 1]} : vector<2x8x32xf32> to vector<2x8x8xf32>
    %62 = vector.extract_strided_slice %19 {offsets = [0, 0, 16], sizes = [2, 8, 8], strides = [1, 1, 1]} : vector<2x8x32xf32> to vector<2x8x8xf32>
    %63 = vector.extract_strided_slice %20 {offsets = [0, 0, 16], sizes = [2, 8, 8], strides = [1, 1, 1]} : vector<2x8x32xf32> to vector<2x8x8xf32>
    "tpu.trace_start"() <{level = 10 : i32, message = "bqd,bkd->bqk"}> : () -> ()
    %cst_23 = arith.constant dense<0.000000e+00> : vector<2x8x8xf32>
    %64 = tpu.matmul %61, %62, %cst_23 {dimension_numbers = #tpu.dot_dimension_numbers<[2], [2], [1], [1], [0, 0, 0, 1, 1, 1], [0], [0]>} : vector<2x8x8xf32>, vector<2x8x8xf32>, vector<2x8x8xf32> -> vector<2x8x8xf32>
    "tpu.trace_stop"() : () -> ()
    %c2 = arith.constant 2 : index
    %c0_24 = arith.constant 0 : index
    %c0_25 = arith.constant 0 : index
    %65 = vector.load %arg7[%c2, %c0_24, %c0_25] : memref<4x8x8xf32, #tpu.memory_space<vmem>>, vector<1x8x8xf32>
    %66 = vector.shape_cast %65 : vector<1x8x8xf32> to vector<8x8xf32>
    %67 = vector.shape_cast %66 : vector<8x8xf32> to vector<1x8x8xf32>
    %68 = vector.broadcast %67 : vector<1x8x8xf32> to vector<2x8x8xf32>
    %69 = arith.addf %64, %68 : vector<2x8x8xf32>
    %cst_26 = arith.constant dense<0xFF800000> : vector<2x8xf32>
    %70 = vector.multi_reduction <maximumf>, %69, %cst_26 [2] : vector<2x8x8xf32> to vector<2x8xf32>
    %71 = vector.shape_cast %70 : vector<2x8xf32> to vector<2x8x1xf32>
    %72 = vector.broadcast %71 : vector<2x8x1xf32> to vector<2x8x8xf32>
    %73 = arith.subf %69, %72 : vector<2x8x8xf32>
    %74 = math.exp %73 : vector<2x8x8xf32>
    %cst_27 = arith.constant dense<0.000000e+00> : vector<2x8xf32>
    %75 = vector.multi_reduction <add>, %74, %cst_27 [2] : vector<2x8x8xf32> to vector<2x8xf32>
    %76 = vector.shape_cast %75 : vector<2x8xf32> to vector<2x8x1xf32>
    %77 = tpu.reciprocal %76 {approx = true} : vector<2x8x1xf32> -> vector<2x8x1xf32>
    %78 = vector.broadcast %77 : vector<2x8x1xf32> to vector<2x8x8xf32>
    %79 = arith.mulf %74, %78 : vector<2x8x8xf32>
    "tpu.trace_start"() <{level = 10 : i32, message = "bqk,bkd->bqd"}> : () -> ()
    %cst_28 = arith.constant dense<0.000000e+00> : vector<2x8x8xf32>
    %80 = tpu.matmul %79, %63, %cst_28 {dimension_numbers = #tpu.dot_dimension_numbers<[2], [1], [1], [2], [0, 0, 0, 1, 1, 2], [0], [0]>} : vector<2x8x8xf32>, vector<2x8x8xf32>, vector<2x8x8xf32> -> vector<2x8x8xf32>
    "tpu.trace_stop"() : () -> ()
    %81 = vector.extract_strided_slice %18 {offsets = [0, 0, 24], sizes = [2, 8, 8], strides = [1, 1, 1]} : vector<2x8x32xf32> to vector<2x8x8xf32>
    %82 = vector.extract_strided_slice %19 {offsets = [0, 0, 24], sizes = [2, 8, 8], strides = [1, 1, 1]} : vector<2x8x32xf32> to vector<2x8x8xf32>
    %83 = vector.extract_strided_slice %20 {offsets = [0, 0, 24], sizes = [2, 8, 8], strides = [1, 1, 1]} : vector<2x8x32xf32> to vector<2x8x8xf32>
    "tpu.trace_start"() <{level = 10 : i32, message = "bqd,bkd->bqk"}> : () -> ()
    %cst_29 = arith.constant dense<0.000000e+00> : vector<2x8x8xf32>
    %84 = tpu.matmul %81, %82, %cst_29 {dimension_numbers = #tpu.dot_dimension_numbers<[2], [2], [1], [1], [0, 0, 0, 1, 1, 1], [0], [0]>} : vector<2x8x8xf32>, vector<2x8x8xf32>, vector<2x8x8xf32> -> vector<2x8x8xf32>
    "tpu.trace_stop"() : () -> ()
    %c3 = arith.constant 3 : index
    %c0_30 = arith.constant 0 : index
    %c0_31 = arith.constant 0 : index
    %85 = vector.load %arg7[%c3, %c0_30, %c0_31] : memref<4x8x8xf32, #tpu.memory_space<vmem>>, vector<1x8x8xf32>
    %86 = vector.shape_cast %85 : vector<1x8x8xf32> to vector<8x8xf32>
    %87 = vector.shape_cast %86 : vector<8x8xf32> to vector<1x8x8xf32>
    %88 = vector.broadcast %87 : vector<1x8x8xf32> to vector<2x8x8xf32>
    %89 = arith.addf %84, %88 : vector<2x8x8xf32>
    %cst_32 = arith.constant dense<0xFF800000> : vector<2x8xf32>
    %90 = vector.multi_reduction <maximumf>, %89, %cst_32 [2] : vector<2x8x8xf32> to vector<2x8xf32>
    %91 = vector.shape_cast %90 : vector<2x8xf32> to vector<2x8x1xf32>
    %92 = vector.broadcast %91 : vector<2x8x1xf32> to vector<2x8x8xf32>
    %93 = arith.subf %89, %92 : vector<2x8x8xf32>
    %94 = math.exp %93 : vector<2x8x8xf32>
    %cst_33 = arith.constant dense<0.000000e+00> : vector<2x8xf32>
    %95 = vector.multi_reduction <add>, %94, %cst_33 [2] : vector<2x8x8xf32> to vector<2x8xf32>
    %96 = vector.shape_cast %95 : vector<2x8xf32> to vector<2x8x1xf32>
    %97 = tpu.reciprocal %96 {approx = true} : vector<2x8x1xf32> -> vector<2x8x1xf32>
    %98 = vector.broadcast %97 : vector<2x8x1xf32> to vector<2x8x8xf32>
    %99 = arith.mulf %94, %98 : vector<2x8x8xf32>
    "tpu.trace_start"() <{level = 10 : i32, message = "bqk,bkd->bqd"}> : () -> ()
    %cst_34 = arith.constant dense<0.000000e+00> : vector<2x8x8xf32>
    %100 = tpu.matmul %99, %83, %cst_34 {dimension_numbers = #tpu.dot_dimension_numbers<[2], [1], [1], [2], [0, 0, 0, 1, 1, 2], [0], [0]>} : vector<2x8x8xf32>, vector<2x8x8xf32>, vector<2x8x8xf32> -> vector<2x8x8xf32>
    "tpu.trace_stop"() : () -> ()
    %101 = tpu.concatenate %40, %60, %80, %100 in 2 : vector<2x8x8xf32>, vector<2x8x8xf32>, vector<2x8x8xf32>, vector<2x8x8xf32> -> vector<2x8x32xf32>
    %102 = vector.shape_cast %101 : vector<2x8x32xf32> to vector<16x32xf32>
    %c0_35 = arith.constant 0 : index
    %c0_36 = arith.constant 0 : index
    %103 = vector.load %arg3[%c0_35, %c0_36] : memref<32x32xf32, #tpu.memory_space<vmem>>, vector<32x32xf32>
    %cst_37 = arith.constant dense<0.000000e+00> : vector<16x32xf32>
    %104 = tpu.matmul %102, %103, %cst_37 {dimension_numbers = #tpu.dot_dimension_numbers<[1], [0], [0], [1], [0, 0, 1, 1], [], []>} : vector<16x32xf32>, vector<32x32xf32>, vector<16x32xf32> -> vector<16x32xf32>
    %105 = vector.shape_cast %104 : vector<16x32xf32> to vector<2x8x32xf32>
    %106 = arith.addf %0, %105 : vector<2x8x32xf32>
    %107 = arith.mulf %106, %106 : vector<2x8x32xf32>
    %cst_38 = arith.constant dense<0.000000e+00> : vector<2x8xf32>
    %108 = vector.multi_reduction <add>, %107, %cst_38 [2] : vector<2x8x32xf32> to vector<2x8xf32>
    %109 = vector.shape_cast %108 : vector<2x8xf32> to vector<2x8x1xf32>
    %cst_39 = arith.constant 3.200000e+01 : f32
    %110 = vector.broadcast %cst_39 : f32 to vector<2x8x1xf32>
    %111 = arith.divf %109, %110 : vector<2x8x1xf32>
    %cst_40 = arith.constant 9.99999997E-7 : f32
    %112 = vector.broadcast %cst_40 : f32 to vector<2x8x1xf32>
    %113 = arith.addf %111, %112 : vector<2x8x1xf32>
    %114 = math.rsqrt %113 : vector<2x8x1xf32>
    %115 = vector.broadcast %114 : vector<2x8x1xf32> to vector<2x8x32xf32>
    %116 = arith.mulf %106, %115 : vector<2x8x32xf32>
    %c0_41 = arith.constant 0 : index
    %c0_42 = arith.constant 0 : index
    %c0_43 = arith.constant 0 : index
    %117 = vector.load %arg4[%c0_41, %c0_42, %c0_43] : memref<1x1x32xf32, #tpu.memory_space<vmem>>, vector<1x1x32xf32>
    %118 = vector.broadcast %117 : vector<1x1x32xf32> to vector<2x8x32xf32>
    %119 = arith.mulf %116, %118 : vector<2x8x32xf32>
    %120 = vector.shape_cast %119 : vector<2x8x32xf32> to vector<16x32xf32>
    %c0_44 = arith.constant 0 : index
    %c0_45 = arith.constant 0 : index
    %121 = vector.load %arg5[%c0_44, %c0_45] : memref<32x128xf32, #tpu.memory_space<vmem>>, vector<32x128xf32>
    %cst_46 = arith.constant dense<0.000000e+00> : vector<16x128xf32>
    %122 = tpu.matmul %120, %121, %cst_46 {dimension_numbers = #tpu.dot_dimension_numbers<[1], [0], [0], [1], [0, 0, 1, 1], [], []>} : vector<16x32xf32>, vector<32x128xf32>, vector<16x128xf32> -> vector<16x128xf32>
    %123 = vector.extract_strided_slice %122 {offsets = [0, 0], sizes = [16, 64], strides = [1, 1]} : vector<16x128xf32> to vector<16x64xf32>
    %124 = vector.extract_strided_slice %122 {offsets = [0, 64], sizes = [16, 64], strides = [1, 1]} : vector<16x128xf32> to vector<16x64xf32>
    %cst_47 = arith.constant 5.000000e-01 : f32
    %125 = vector.broadcast %cst_47 : f32 to vector<16x64xf32>
    %126 = arith.mulf %125, %123 : vector<16x64xf32>
    %cst_48 = arith.constant 4.471500e-02 : f32
    %127 = vector.broadcast %cst_48 : f32 to vector<16x64xf32>
    %128 = arith.mulf %127, %123 : vector<16x64xf32>
    %129 = arith.mulf %128, %123 : vector<16x64xf32>
    %130 = arith.mulf %129, %123 : vector<16x64xf32>
    %131 = arith.addf %123, %130 : vector<16x64xf32>
    %cst_49 = arith.constant 0.797884583 : f32
    %132 = vector.broadcast %cst_49 : f32 to vector<16x64xf32>
    %133 = arith.mulf %132, %131 : vector<16x64xf32>
    %134 = math.tanh %133 : vector<16x64xf32>
    %cst_50 = arith.constant 1.000000e+00 : f32
    %135 = vector.broadcast %cst_50 : f32 to vector<16x64xf32>
    %136 = arith.addf %135, %134 : vector<16x64xf32>
    %137 = arith.mulf %126, %136 : vector<16x64xf32>
    %138 = arith.mulf %137, %124 : vector<16x64xf32>
    %c0_51 = arith.constant 0 : index
    %c0_52 = arith.constant 0 : index
    %139 = vector.load %arg6[%c0_51, %c0_52] : memref<64x32xf32, #tpu.memory_space<vmem>>, vector<64x32xf32>
    %cst_53 = arith.constant dense<0.000000e+00> : vector<16x32xf32>
    %140 = tpu.matmul %138, %139, %cst_53 {dimension_numbers = #tpu.dot_dimension_numbers<[1], [0], [0], [1], [0, 0, 1, 1], [], []>} : vector<16x64xf32>, vector<64x32xf32>, vector<16x32xf32> -> vector<16x32xf32>
    %141 = vector.shape_cast %140 : vector<16x32xf32> to vector<2x8x32xf32>
    %142 = arith.addf %106, %141 : vector<2x8x32xf32>
    %c0_54 = arith.constant 0 : index
    %c0_55 = arith.constant 0 : index
    %c0_56 = arith.constant 0 : index
    %143 = vector.load %arg8[%c0_54, %c0_55, %c0_56] : memref<2x8x32xf32, #tpu.memory_space<vmem>>, vector<2x8x32xf32>
    tpu.vector_store %arg8[%c0_54, %c0_55, %c0_56], %142 {strides = array<i32>} : memref<2x8x32xf32, #tpu.memory_space<vmem>>, vector<2x8x32xf32>,
    return
  }
}

</mosaic_0001>

<llo_original>
// kernel: neuron_flux_t5_text_encoder_forward.5
$region0: #{neuron_flux_t5_text_encoder_forward.5}
  #allocation0 [shape = 'u32[]', space=smem, size = 0x4, offset = 0x4, fixed_abs, tag = 'smem constant byte address 0x4 - core index']
  #allocation1 [shape = 'u32[144,128]{1,0:T(1,128)}', space=vmem, size = 0x12000, scoped, tag = 'internal scratch']
  %s0 = inlined_call_operand.vmem [shape: f32[2,8,32], index: 0, kind: input, shape index: {}]
  %s1 = inlined_call_operand.vmem [shape: f32[1,1,32], index: 1, kind: input, shape index: {}]
  %s2 = inlined_call_operand.hbm [shape: f32[2,8,32], index: 2, kind: output, shape index: {}]
  %s3 = sld [smem:[#allocation0]]
  $region18: #{neuron_flux_t5_text_encoder_forward.5} parent=0
    _
  %s5 = ssub.s32 1, %s3
  %s6 = scalar_select 0, %s5, %s3
  $region1: #{neuron_flux_t5_text_encoder_forward.5} parent=0
    #allocation2 [shape = 'u8[8192]{0}', space=vmem, size = 0x2000, scoped, tag = 'output window, operand 0, single buffered']
    #allocation3 [shape = 's32[1]{0}', space=sflag, size = 0x4, scoped, tag = 'scoped memory for neuron_flux_t5_text_encoder_forward.5']
    %7 = vsyncpa [#allocation3], 0
    // Predicated region
    $region2: #{neuron_flux_t5_text_encoder_forward.5} parent=1 // pred_check
      _
    $region3: #{neuron_flux_t5_text_encoder_forward.5} parent=1 // pred_check_branch
      %9 = sbr.rel (0) target = $region5
    $region4: #{neuron_flux_t5_text_encoder_forward.5} parent=1 // pred_region
      _
    $region5: #{neuron_flux_t5_text_encoder_forward.5} parent=1 // pred_fallthru
      _
    // Predicated region
    $region6: #{neuron_flux_t5_text_encoder_forward.5} parent=1 // pred_check
      _
    $region7: #{neuron_flux_t5_text_encoder_forward.5} parent=1 // pred_check_branch
      %11 = sbr.rel (0) target = $region9
    $region8: #{neuron_flux_t5_text_encoder_forward.5} parent=1 // pred_region
      _
    $region9: #{neuron_flux_t5_text_encoder_forward.5} parent=1 // pred_fallthru
      _
    %v12 = vld [vmem:[%s0] sm:$0xff]
    %v13 = vld [vmem:[%s0 + $0x8] sm:$0xff]
    %v14 = vmul.f32 %v12, %v12
    %v15 = vmul.f32 %v13, %v13
    %vm16 = vcmask 261120
    %v17 = vsel %vm16, %v14, 0.0
    %18 = vadd.xlane.f32.xlu0 %v17
    %v19 = vpop.xlane.xlu0 %18
    %v20 = vsel %vm16, %v15, 0.0
    %21 = vadd.xlane.f32.xlu0 %v20
    %v22 = vpop.xlane.xlu0 %21
    %v23 = vrcp.pop 32.0
    %v24 = vmul.f32 %v19, %v23
    %v25 = vmul.f32 %v22, %v23
    %v26 = vadd.f32 %v24, 1e-06
    %v27 = vadd.f32 %v25, 1e-06
    %v28 = vrsqrt.pop %v26
    %v29 = vrsqrt.pop %v27
    %v30 = vmul.f32 %v12, %v28
    %v31 = vmul.f32 %v13, %v29
    %v32 = vld [vmem:[%s1] sm:$0x1]
    %v34 = vlaneseq
    %v35 = vshrl.u32 %v34, 7
    %v36 = vsub.s32 0, %v35
    %v37 = vrot.slane %v32, %v36
    %v39 = vmul.f32 %v30, %v37
    %v40 = vmul.f32 %v31, %v37
    %41 = vst.msk [vmem:[#allocation2] sm:$0xff] %vm16, %v39
    %42 = vst.msk [vmem:[#allocation2 + $0x8] sm:$0xff] %vm16, %v40
    // Predicated region
    $region10: #{neuron_flux_t5_text_encoder_forward.5} parent=1 // pred_check
      _
    $region11: #{neuron_flux_t5_text_encoder_forward.5} parent=1 // pred_check_branch
      %44 = sbr.rel (0) target = $region13
    $region12: #{neuron_flux_t5_text_encoder_forward.5} parent=1 // pred_region
      %s46 = ssub.s32 256, 256
      %47 = vsyncadd [#allocation3], %s46
      %s48 = sshll.u32 [#allocation2], 4
      %s49 = int_to_ptr.vmem [resolvable:$true] %s48
      %54 = dma.vmem_to_hbm [thread:$0]  %s49, 256, %s2, [#allocation3], 128, 128, 8
    $region13: #{neuron_flux_t5_text_encoder_forward.5} parent=1 // pred_fallthru
      _
    // Predicated region
    $region14: #{neuron_flux_t5_text_encoder_forward.5} parent=1 // pred_check
      _
    $region15: #{neuron_flux_t5_text_encoder_forward.5} parent=1 // pred_check_branch
      %56 = sbr.rel (0) target = $region17
    $region16: #{neuron_flux_t5_text_encoder_forward.5} parent=1 // pred_region
      %57 = dma.done [#allocation3], 256
    $region17: #{neuron_flux_t5_text_encoder_forward.5} parent=1 // pred_fallthru
      _
    %58 = vsyncpa [#allocation3], 1

// kernel: neuron_flux_t5_text_encoder_forward.3
$region0: #{neuron_flux_t5_text_encoder_forward.3}
  #allocation0 [shape = 'u32[]', space=smem, size = 0x4, offset = 0x4, fixed_abs, tag = 'smem constant byte address 0x4 - core index']
  #allocation1 [shape = 'u32[144,128]{1,0:T(1,128)}', space=vmem, size = 0x12000, scoped, tag = 'internal scratch']
  %s0 = inlined_call_operand.vmem [shape: f32[2,8,32], index: 0, kind: input, shape index: {}]
  %s1 = inlined_call_operand.vmem [shape: f32[1,1,32], index: 1, kind: input, shape index: {}, may-alias: {1,4}]
  %s2 = inlined_call_operand.vmem [shape: f32[32,96], index: 2, kind: input, shape index: {}]
  %s3 = inlined_call_operand.vmem [shape: f32[32,32], index: 3, kind: input, shape index: {}]
  %s4 = inlined_call_operand.vmem [shape: f32[1,1,32], index: 4, kind: input, shape index: {}, may-alias: {1,4}]
  %s5 = inlined_call_operand.vmem [shape: f32[32,128], index: 5, kind: input, shape index: {}]
  %s6 = inlined_call_operand.vmem [shape: f32[64,32], index: 6, kind: input, shape index: {}]
  %s7 = inlined_call_operand.vmem [shape: f32[4,8,8], index: 7, kind: input, shape index: {}]
  %s8 = inlined_call_operand.vmem [shape: f32[2,8,32], index: 8, kind: output, shape index: {}]
  %s9 = sld [smem:[#allocation0]]
  $region42: #{neuron_flux_t5_text_encoder_forward.3} parent=0
    _
  %s11 = ssub.s32 1, %s9
  %s12 = scalar_select 0, %s11, %s9
  // Predicated region
  $region2: #{neuron_flux_t5_text_encoder_forward.3} parent=0 // pred_check
    _
  $region3: #{neuron_flux_t5_text_encoder_forward.3} parent=0 // pred_check_branch
    %14 = sbr.rel (0) target = $region5
  $region4: #{neuron_flux_t5_text_encoder_forward.3} parent=0 // pred_region
    _
  $region5: #{neuron_flux_t5_text_encoder_forward.3} parent=0 // pred_fallthru
    _
  // Predicated region
  $region6: #{neuron_flux_t5_text_encoder_forward.3} parent=0 // pred_check
    _
  $region7: #{neuron_flux_t5_text_encoder_forward.3} parent=0 // pred_check_branch
    %16 = sbr.rel (0) target = $region9
  $region8: #{neuron_flux_t5_text_encoder_forward.3} parent=0 // pred_region
    _
  $region9: #{neuron_flux_t5_text_encoder_forward.3} parent=0 // pred_fallthru
    _
  // Predicated region
  $region10: #{neuron_flux_t5_text_encoder_forward.3} parent=0 // pred_check
    _
  $region11: #{neuron_flux_t5_text_encoder_forward.3} parent=0 // pred_check_branch
    %18 = sbr.rel (0) target = $region13
  $region12: #{neuron_flux_t5_text_encoder_forward.3} parent=0 // pred_region
    _
  $region13: #{neuron_flux_t5_text_encoder_forward.3} parent=0 // pred_fallthru
    _
  // Predicated region
  $region14: #{neuron_flux_t5_text_encoder_forward.3} parent=0 // pred_check
    _
  $region15: #{neuron_flux_t5_text_encoder_forward.3} parent=0 // pred_check_branch
    %20 = sbr.rel (0) target = $region17
  $region16: #{neuron_flux_t5_text_encoder_forward.3} parent=0 // pred_region
    _
  $region17: #{neuron_flux_t5_text_encoder_forward.3} parent=0 // pred_fallthru
    _
  // Predicated region
  $region18: #{neuron_flux_t5_text_encoder_forward.3} parent=0 // pred_check
    _
  $region19: #{neuron_flux_t5_text_encoder_forward.3} parent=0 // pred_check_branch
    %22 = sbr.rel (0) target = $region21
  $region20: #{neuron_flux_t5_text_encoder_forward.3} parent=0 // pred_region
    _
  $region21: #{neuron_flux_t5_text_encoder_forward.3} parent=0 // pred_fallthru
    _
  // Predicated region
  $region22: #{neuron_flux_t5_text_encoder_forward.3} parent=0 // pred_check
    _
  $region23: #{neuron_flux_t5_text_encoder_forward.3} parent=0 // pred_check_branch
    %24 = sbr.rel (0) target = $region25
  $region24: #{neuron_flux_t5_text_encoder_forward.3} parent=0 // pred_region
    _
  $region25: #{neuron_flux_t5_text_encoder_forward.3} parent=0 // pred_fallthru
    _
  // Predicated region
  $region26: #{neuron_flux_t5_text_encoder_forward.3} parent=0 // pred_check
    _
  $region27: #{neuron_flux_t5_text_encoder_forward.3} parent=0 // pred_check_branch
    %26 = sbr.rel (0) target = $region29
  $region28: #{neuron_flux_t5_text_encoder_forward.3} parent=0 // pred_region
    _
  $region29: #{neuron_flux_t5_text_encoder_forward.3} parent=0 // pred_fallthru
    _
  // Predicated region
  $region30: #{neuron_flux_t5_text_encoder_forward.3} parent=0 // pred_check
    _
  $region31: #{neuron_flux_t5_text_encoder_forward.3} parent=0 // pred_check_branch
    %28 = sbr.rel (0) target = $region33
  $region32: #{neuron_flux_t5_text_encoder_forward.3} parent=0 // pred_region
    _
  $region33: #{neuron_flux_t5_text_encoder_forward.3} parent=0 // pred_fallthru
    _
  %v29 = vld [vmem:[%s0] sm:$0xff]
  %v30 = vld [vmem:[%s0 + $0x8] sm:$0xff]
  %v31 = vmul.f32 %v29, %v29
  %v32 = vmul.f32 %v30, %v30
  %vm33 = vcmask 261120
  %v34 = vsel %vm33, %v31, 0.0
  %35 = vadd.xlane.f32.xlu0 %v34
  %v36 = vpop.xlane.xlu0 %35
  %v37 = vsel %vm33, %v32, 0.0
  %38 = vadd.xlane.f32.xlu0 %v37
  %v39 = vpop.xlane.xlu0 %38
  %v40 = vrcp.pop 32.0
  %v41 = vmul.f32 %v36, %v40
  %v42 = vmul.f32 %v39, %v40
  %v43 = vadd.f32 %v41, 1e-06
  %v44 = vadd.f32 %v42, 1e-06
  %v45 = vrsqrt.pop %v43
  %v46 = vrsqrt.pop %v44
  %v47 = vmul.f32 %v29, %v45
  %v48 = vmul.f32 %v30, %v46
  %v49 = vld [vmem:[%s1] sm:$0x1]
  %v51 = vlaneseq
  %v52 = vshrl.u32 %v51, 7
  %v53 = vsub.s32 0, %v52
  %v54 = vrot.slane %v49, %v53
  %v56 = vmul.f32 %v47, %v54
  %v57 = vmul.f32 %v48, %v54
  %v58 = vld [vmem:[%s2] sm:$0xff]
  %v59 = vld [vmem:[%s2 + $0x8] sm:$0xff]
  %v60 = vld [vmem:[%s2 + $0x10] sm:$0xff]
  %v61 = vld [vmem:[%s2 + $0x18] sm:$0xff]
  %v63 = vsel %vm33, %v56, 0
  %v66 = vsel %vm33, %v57, 0
  %68 = vmatprep.subr.mxu0 0.0
  %69 = vmatpush1.msra.mxu0 %v58
  %70 = vmatprep.subr.mxu0 0.0
  %71 = vmatpush1.msra.mxu0 %v59
  %72 = vmatprep.subr.mxu0 0.0
  %73 = vmatpush1.msra.mxu0 %v60
  %74 = vmatprep.subr.mxu0 0.0
  %75 = vmatpush1.msra.mxu0 %v61
  %76 = vmatprep.subr.mxu0 0.0
  %77 = vmatpush1.msra.mxu0 0.0
  %78 = vmatprep.subr.mxu0 0.0
  %79 = vmatpush1.msra.mxu0 0.0
  %80 = vmatprep.subr.mxu0 0.0
  %81 = vmatpush1.msra.mxu0 0.0
  %82 = vmatprep.subr.mxu0 0.0
  %83 = vmatpush1.msra.mxu0 0.0
  %84 = vmatprep.subr.mxu0 0.0
  %85 = vmatpush1.msra.mxu0 0.0
  %86 = vmatprep.subr.mxu0 0.0
  %87 = vmatpush1.msra.mxu0 0.0
  %88 = vmatprep.subr.mxu0 0.0
  %89 = vmatpush1.msra.mxu0 0.0
  %90 = vmatprep.subr.mxu0 0.0
  %91 = vmatpush1.msra.mxu0 0.0
  %92 = vmatprep.subr.mxu0 0.0
  %93 = vmatpush1.msra.mxu0 0.0
  %94 = vmatprep.subr.mxu0 0.0
  %95 = vmatpush1.msra.mxu0 0.0
  %96 = vmatprep.subr.mxu0 0.0
  %97 = vmatpush1.msra.mxu0 0.0
  %98 = vmatprep.subr.mxu0 0.0
  %99 = vmatpush1.msra.mxu0 0.0
  %100 = vmatprep.subr.mxu0 0.0
  %101 = vmatpush1.msra.mxu0 0.0
  %102 = vmatprep.subr.mxu0 0.0
  %103 = vmatpush1.msra.mxu0 0.0
  %104 = vmatprep.subr.mxu0 0.0
  %105 = vmatpush1.msra.mxu0 0.0
  %106 = vmatprep.subr.mxu0 0.0
  %107 = vmatpush1.msra.mxu0 0.0
  %108 = vmatprep.subr.mxu0 0.0
  %109 = vmatpush1.msra.mxu0 0.0
  %110 = vmatprep.subr.mxu0 0.0
  %111 = vmatpush1.msra.mxu0 0.0
  %112 = vmatprep.subr.mxu0 0.0
  %113 = vmatpush1.msra.mxu0 0.0
  %114 = vmatprep.subr.mxu0 0.0
  %115 = vmatpush1.msra.mxu0 0.0
  %116 = vmatprep.subr.mxu0 0.0
  %117 = vmatpush1.msra.mxu0 0.0
  %118 = vmatprep.subr.mxu0 0.0
  %119 = vmatpush1.msra.mxu0 0.0
  %120 = vmatprep.subr.mxu0 0.0
  %121 = vmatpush1.msra.mxu0 0.0
  %122 = vmatprep.subr.mxu0 0.0
  %123 = vmatpush1.msra.mxu0 0.0
  %124 = vmatprep.subr.mxu0 0.0
  %125 = vmatpush1.msra.mxu0 0.0
  %126 = vmatprep.subr.mxu0 0.0
  %127 = vmatpush1.msra.mxu0 0.0
  %128 = vmatprep.subr.mxu0 0.0
  %129 = vmatpush1.msra.mxu0 0.0
  %130 = vmatprep.subr.mxu0 0.0
  %131 = vmatpush1.msra.mxu0 0.0
  %132 = vmatprep.mubr.f32.mxu0 0.0
  %133 = vmatmul.mubr.f32.gmra.mrb[0].mxu0 %v63
  %v134 = vpop.f32.mrb[0].mxu0
  %v135 = vadd.f32 0.0, %v134
  %v136 = vpop.f32.mrb[0].mxu0
  %137 = vmatprep.mubr.f32.mxu0 0.0
  %138 = vmatmul.mubr.f32.gmra.mrb[0].mxu0 %v66
  %v139 = vpop.f32.mrb[0].mxu0
  %v140 = vadd.f32 0.0, %v139
  %v141 = vpop.f32.mrb[0].mxu0
  %142 = vdwg.mxu0
  %v143 = vld [vmem:[%s7] sm:$0xff]
  %145 = vrot.lane.b32.xlu0 %v135, 96
  %v146 = vpop.permute.xlu0 %145
  %vm147 = vcmask 64512
  %v148 = vsel %vm147, %v135, 0
  %v150 = vsel %vm147, %v146, 0
  %152 = vmatprep.subr.mxu0 0.0
  %153 = vmatpush1.xpose.msra.mxu0 %v150
  %154 = vmatprep.subr.mxu0 0.0
  %155 = vmatpush1.xpose.msra.mxu0 0.0
  %156 = vmatprep.subr.mxu0 0.0
  %157 = vmatpush1.xpose.msra.mxu0 0.0
  %158 = vmatprep.subr.mxu0 0.0
  %159 = vmatpush1.xpose.msra.mxu0 0.0
  %160 = vmatprep.subr.mxu0 0.0
  %161 = vmatpush1.xpose.msra.mxu0 0.0
  %162 = vmatprep.subr.mxu0 0.0
  %163 = vmatpush1.xpose.msra.mxu0 0.0
  %164 = vmatprep.subr.mxu0 0.0
  %165 = vmatpush1.xpose.msra.mxu0 0.0
  %166 = vmatprep.subr.mxu0 0.0
  %167 = vmatpush1.xpose.msra.mxu0 0.0
  %168 = vmatprep.subr.mxu0 0.0
  %169 = vmatpush1.xpose.msra.mxu0 0.0
  %170 = vmatprep.subr.mxu0 0.0
  %171 = vmatpush1.xpose.msra.mxu0 0.0
  %172 = vmatprep.subr.mxu0 0.0
  %173 = vmatpush1.xpose.msra.mxu0 0.0
  %174 = vmatprep.subr.mxu0 0.0
  %175 = vmatpush1.xpose.msra.mxu0 0.0
  %176 = vmatprep.subr.mxu0 0.0
  %177 = vmatpush1.xpose.msra.mxu0 0.0
  %178 = vmatprep.subr.mxu0 0.0
  %179 = vmatpush1.xpose.msra.mxu0 0.0
  %180 = vmatprep.subr.mxu0 0.0
  %181 = vmatpush1.xpose.msra.mxu0 0.0
  %182 = vmatprep.subr.mxu0 0.0
  %183 = vmatpush1.xpose.msra.mxu0 0.0
  %184 = vmatprep.subr.mxu0 0.0
  %185 = vmatpush1.xpose.msra.mxu0 0.0
  %186 = vmatprep.subr.mxu0 0.0
  %187 = vmatpush1.xpose.msra.mxu0 0.0
  %188 = vmatprep.subr.mxu0 0.0
  %189 = vmatpush1.xpose.msra.mxu0 0.0
  %190 = vmatprep.subr.mxu0 0.0
  %191 = vmatpush1.xpose.msra.mxu0 0.0
  %192 = vmatprep.subr.mxu0 0.0
  %193 = vmatpush1.xpose.msra.mxu0 0.0
  %194 = vmatprep.subr.mxu0 0.0
  %195 = vmatpush1.xpose.msra.mxu0 0.0
  %196 = vmatprep.subr.mxu0 0.0
  %197 = vmatpush1.xpose.msra.mxu0 0.0
  %198 = vmatprep.subr.mxu0 0.0
  %199 = vmatpush1.xpose.msra.mxu0 0.0
  %200 = vmatprep.subr.mxu0 0.0
  %201 = vmatpush1.xpose.msra.mxu0 0.0
  %202 = vmatprep.subr.mxu0 0.0
  %203 = vmatpush1.xpose.msra.mxu0 0.0
  %204 = vmatprep.subr.mxu0 0.0
  %205 = vmatpush1.xpose.msra.mxu0 0.0
  %206 = vmatprep.subr.mxu0 0.0
  %207 = vmatpush1.xpose.msra.mxu0 0.0
  %208 = vmatprep.subr.mxu0 0.0
  %209 = vmatpush1.xpose.msra.mxu0 0.0
  %210 = vmatprep.subr.mxu0 0.0
  %211 = vmatpush1.xpose.msra.mxu0 0.0
  %212 = vmatprep.subr.mxu0 0.0
  %213 = vmatpush1.xpose.msra.mxu0 0.0
  %214 = vmatprep.subr.mxu0 0.0
  %215 = vmatpush1.xpose.msra.mxu0 0.0
  %216 = vmatprep.mubr.f32.mxu0 0.0
  %217 = vmatmul.mubr.f32.gmra.mrb[0].mxu0 %v148
  %v218 = vpop.f32.mrb[0].mxu0
  %v219 = vadd.f32 %v143, %v218
  %v220 = vpop.f32.mrb[0].mxu0
  %221 = vdwg.mxu0
  %223 = vrot.lane.b32.xlu0 %v140, 96
  %v224 = vpop.permute.xlu0 %223
  %v225 = vsel %vm147, %v140, 0
  %v227 = vsel %vm147, %v224, 0
  %229 = vmatprep.subr.mxu0 0.0
  %230 = vmatpush1.xpose.msra.mxu0 %v227
  %231 = vmatprep.subr.mxu0 0.0
  %232 = vmatpush1.xpose.msra.mxu0 0.0
  %233 = vmatprep.subr.mxu0 0.0
  %234 = vmatpush1.xpose.msra.mxu0 0.0
  %235 = vmatprep.subr.mxu0 0.0
  %236 = vmatpush1.xpose.msra.mxu0 0.0
  %237 = vmatprep.subr.mxu0 0.0
  %238 = vmatpush1.xpose.msra.mxu0 0.0
  %239 = vmatprep.subr.mxu0 0.0
  %240 = vmatpush1.xpose.msra.mxu0 0.0
  %241 = vmatprep.subr.mxu0 0.0
  %242 = vmatpush1.xpose.msra.mxu0 0.0
  %243 = vmatprep.subr.mxu0 0.0
  %244 = vmatpush1.xpose.msra.mxu0 0.0
  %245 = vmatprep.subr.mxu0 0.0
  %246 = vmatpush1.xpose.msra.mxu0 0.0
  %247 = vmatprep.subr.mxu0 0.0
  %248 = vmatpush1.xpose.msra.mxu0 0.0
  %249 = vmatprep.subr.mxu0 0.0
  %250 = vmatpush1.xpose.msra.mxu0 0.0
  %251 = vmatprep.subr.mxu0 0.0
  %252 = vmatpush1.xpose.msra.mxu0 0.0
  %253 = vmatprep.subr.mxu0 0.0
  %254 = vmatpush1.xpose.msra.mxu0 0.0
  %255 = vmatprep.subr.mxu0 0.0
  %256 = vmatpush1.xpose.msra.mxu0 0.0
  %257 = vmatprep.subr.mxu0 0.0
  %258 = vmatpush1.xpose.msra.mxu0 0.0
  %259 = vmatprep.subr.mxu0 0.0
  %260 = vmatpush1.xpose.msra.mxu0 0.0
  %261 = vmatprep.subr.mxu0 0.0
  %262 = vmatpush1.xpose.msra.mxu0 0.0
  %263 = vmatprep.subr.mxu0 0.0
  %264 = vmatpush1.xpose.msra.mxu0 0.0
  %265 = vmatprep.subr.mxu0 0.0
  %266 = vmatpush1.xpose.msra.mxu0 0.0
  %267 = vmatprep.subr.mxu0 0.0
  %268 = vmatpush1.xpose.msra.mxu0 0.0
  %269 = vmatprep.subr.mxu0 0.0
  %270 = vmatpush1.xpose.msra.mxu0 0.0
  %271 = vmatprep.subr.mxu0 0.0
  %272 = vmatpush1.xpose.msra.mxu0 0.0
  %273 = vmatprep.subr.mxu0 0.0
  %274 = vmatpush1.xpose.msra.mxu0 0.0
  %275 = vmatprep.subr.mxu0 0.0
  %276 = vmatpush1.xpose.msra.mxu0 0.0
  %277 = vmatprep.subr.mxu0 0.0
  %278 = vmatpush1.xpose.msra.mxu0 0.0
  %279 = vmatprep.subr.mxu0 0.0
  %280 = vmatpush1.xpose.msra.mxu0 0.0
  %281 = vmatprep.subr.mxu0 0.0
  %282 = vmatpush1.xpose.msra.mxu0 0.0
  %283 = vmatprep.subr.mxu0 0.0
  %284 = vmatpush1.xpose.msra.mxu0 0.0
  %285 = vmatprep.subr.mxu0 0.0
  %286 = vmatpush1.xpose.msra.mxu0 0.0
  %287 = vmatprep.subr.mxu0 0.0
  %288 = vmatpush1.xpose.msra.mxu0 0.0
  %289 = vmatprep.subr.mxu0 0.0
  %290 = vmatpush1.xpose.msra.mxu0 0.0
  %291 = vmatprep.subr.mxu0 0.0
  %292 = vmatpush1.xpose.msra.mxu0 0.0
  %293 = vmatprep.mubr.f32.mxu0 0.0
  %294 = vmatmul.mubr.f32.gmra.mrb[0].mxu0 %v225
  %v295 = vpop.f32.mrb[0].mxu0
  %v296 = vadd.f32 %v143, %v295
  %v297 = vpop.f32.mrb[0].mxu0
  %298 = vdwg.mxu0
  %v299 = vsel %vm147, %v219, -inf
  %300 = vmax.xlane.f32.xlu0 %v299
  %v301 = vpop.xlane.xlu0 %300
  %v302 = vsel %vm147, %v296, -inf
  %303 = vmax.xlane.f32.xlu0 %v302
  %v304 = vpop.xlane.xlu0 %303
  %v305 = vsub.f32 %v219, %v301
  %v306 = vsub.f32 %v296, %v304
  %v307 = vmul.f32 %v305, 1.442695
  %v308 = vpow.pop %v307
  %v309 = vmul.f32 %v306, 1.442695
  %v310 = vpow.pop %v309
  %v311 = vsel %vm147, %v308, 0.0
  %312 = vadd.xlane.f32.xlu0 %v311
  %v313 = vpop.xlane.xlu0 %312
  %v314 = vsel %vm147, %v310, 0.0
  %315 = vadd.xlane.f32.xlu0 %v314
  %v316 = vpop.xlane.xlu0 %315
  %v317 = vrcp.pop %v313
  %v318 = vrcp.pop %v316
  %v319 = vmul.f32 %v308, %v317
  %v320 = vmul.f32 %v310, %v318
  %321 = vrot.lane.b32.xlu0 %v135, 64
  %v322 = vpop.permute.xlu0 %321
  %v325 = vsel %vm147, %v319, 0
  %327 = vmatprep.subr.mxu0 0.0
  %328 = vmatpush1.msra.mxu0 %v322
  %329 = vmatprep.subr.mxu0 0.0
  %330 = vmatpush1.msra.mxu0 0.0
  %331 = vmatprep.subr.mxu0 0.0
  %332 = vmatpush1.msra.mxu0 0.0
  %333 = vmatprep.subr.mxu0 0.0
  %334 = vmatpush1.msra.mxu0 0.0
  %335 = vmatprep.subr.mxu0 0.0
  %336 = vmatpush1.msra.mxu0 0.0
  %337 = vmatprep.subr.mxu0 0.0
  %338 = vmatpush1.msra.mxu0 0.0
  %339 = vmatprep.subr.mxu0 0.0
  %340 = vmatpush1.msra.mxu0 0.0
  %341 = vmatprep.subr.mxu0 0.0
  %342 = vmatpush1.msra.mxu0 0.0
  %343 = vmatprep.subr.mxu0 0.0
  %344 = vmatpush1.msra.mxu0 0.0
  %345 = vmatprep.subr.mxu0 0.0
  %346 = vmatpush1.msra.mxu0 0.0
  %347 = vmatprep.subr.mxu0 0.0
  %348 = vmatpush1.msra.mxu0 0.0
  %349 = vmatprep.subr.mxu0 0.0
  %350 = vmatpush1.msra.mxu0 0.0
  %351 = vmatprep.subr.mxu0 0.0
  %352 = vmatpush1.msra.mxu0 0.0
  %353 = vmatprep.subr.mxu0 0.0
  %354 = vmatpush1.msra.mxu0 0.0
  %355 = vmatprep.subr.mxu0 0.0
  %356 = vmatpush1.msra.mxu0 0.0
  %357 = vmatprep.subr.mxu0 0.0
  %358 = vmatpush1.msra.mxu0 0.0
  %359 = vmatprep.subr.mxu0 0.0
  %360 = vmatpush1.msra.mxu0 0.0
  %361 = vmatprep.subr.mxu0 0.0
  %362 = vmatpush1.msra.mxu0 0.0
  %363 = vmatprep.subr.mxu0 0.0
  %364 = vmatpush1.msra.mxu0 0.0
  %365 = vmatprep.subr.mxu0 0.0
  %366 = vmatpush1.msra.mxu0 0.0
  %367 = vmatprep.subr.mxu0 0.0
  %368 = vmatpush1.msra.mxu0 0.0
  %369 = vmatprep.subr.mxu0 0.0
  %370 = vmatpush1.msra.mxu0 0.0
  %371 = vmatprep.subr.mxu0 0.0
  %372 = vmatpush1.msra.mxu0 0.0
  %373 = vmatprep.subr.mxu0 0.0
  %374 = vmatpush1.msra.mxu0 0.0
  %375 = vmatprep.subr.mxu0 0.0
  %376 = vmatpush1.msra.mxu0 0.0
  %377 = vmatprep.subr.mxu0 0.0
  %378 = vmatpush1.msra.mxu0 0.0
  %379 = vmatprep.subr.mxu0 0.0
  %380 = vmatpush1.msra.mxu0 0.0
  %381 = vmatprep.subr.mxu0 0.0
  %382 = vmatpush1.msra.mxu0 0.0
  %383 = vmatprep.subr.mxu0 0.0
  %384 = vmatpush1.msra.mxu0 0.0
  %385 = vmatprep.subr.mxu0 0.0
  %386 = vmatpush1.msra.mxu0 0.0
  %387 = vmatprep.subr.mxu0 0.0
  %388 = vmatpush1.msra.mxu0 0.0
  %389 = vmatprep.subr.mxu0 0.0
  %390 = vmatpush1.msra.mxu0 0.0
  %391 = vmatprep.mubr.f32.mxu0 0.0
  %392 = vmatmul.mubr.f32.gmra.mrb[0].mxu0 %v325
  %v393 = vpop.f32.mrb[0].mxu0
  %v394 = vadd.f32 0.0, %v393
  %v395 = vpop.f32.mrb[0].mxu0
  %396 = vdwg.mxu0
  %397 = vrot.lane.b32.xlu0 %v140, 64
  %v398 = vpop.permute.xlu0 %397
  %v401 = vsel %vm147, %v320, 0
  %403 = vmatprep.subr.mxu0 0.0
  %404 = vmatpush1.msra.mxu0 %v398
  %405 = vmatprep.subr.mxu0 0.0
  %406 = vmatpush1.msra.mxu0 0.0
  %407 = vmatprep.subr.mxu0 0.0
  %408 = vmatpush1.msra.mxu0 0.0
  %409 = vmatprep.subr.mxu0 0.0
  %410 = vmatpush1.msra.mxu0 0.0
  %411 = vmatprep.subr.mxu0 0.0
  %412 = vmatpush1.msra.mxu0 0.0
  %413 = vmatprep.subr.mxu0 0.0
  %414 = vmatpush1.msra.mxu0 0.0
  %415 = vmatprep.subr.mxu0 0.0
  %416 = vmatpush1.msra.mxu0 0.0
  %417 = vmatprep.subr.mxu0 0.0
  %418 = vmatpush1.msra.mxu0 0.0
  %419 = vmatprep.subr.mxu0 0.0
  %420 = vmatpush1.msra.mxu0 0.0
  %421 = vmatprep.subr.mxu0 0.0
  %422 = vmatpush1.msra.mxu0 0.0
  %423 = vmatprep.subr.mxu0 0.0
  %424 = vmatpush1.msra.mxu0 0.0
  %425 = vmatprep.subr.mxu0 0.0
  %426 = vmatpush1.msra.mxu0 0.0
  %427 = vmatprep.subr.mxu0 0.0
  %428 = vmatpush1.msra.mxu0 0.0
  %429 = vmatprep.subr.mxu0 0.0
  %430 = vmatpush1.msra.mxu0 0.0
  %431 = vmatprep.subr.mxu0 0.0
  %432 = vmatpush1.msra.mxu0 0.0
  %433 = vmatprep.subr.mxu0 0.0
  %434 = vmatpush1.msra.mxu0 0.0
  %435 = vmatprep.subr.mxu0 0.0
  %436 = vmatpush1.msra.mxu0 0.0
  %437 = vmatprep.subr.mxu0 0.0
  %438 = vmatpush1.msra.mxu0 0.0
  %439 = vmatprep.subr.mxu0 0.0
  %440 = vmatpush1.msra.mxu0 0.0
  %441 = vmatprep.subr.mxu0 0.0
  %442 = vmatpush1.msra.mxu0 0.0
  %443 = vmatprep.subr.mxu0 0.0
  %444 = vmatpush1.msra.mxu0 0.0
  %445 = vmatprep.subr.mxu0 0.0
  %446 = vmatpush1.msra.mxu0 0.0
  %447 = vmatprep.subr.mxu0 0.0
  %448 = vmatpush1.msra.mxu0 0.0
  %449 = vmatprep.subr.mxu0 0.0
  %450 = vmatpush1.msra.mxu0 0.0
  %451 = vmatprep.subr.mxu0 0.0
  %452 = vmatpush1.msra.mxu0 0.0
  %453 = vmatprep.subr.mxu0 0.0
  %454 = vmatpush1.msra.mxu0 0.0
  %455 = vmatprep.subr.mxu0 0.0
  %456 = vmatpush1.msra.mxu0 0.0
  %457 = vmatprep.subr.mxu0 0.0
  %458 = vmatpush1.msra.mxu0 0.0
  %459 = vmatprep.subr.mxu0 0.0
  %460 = vmatpush1.msra.mxu0 0.0
  %461 = vmatprep.subr.mxu0 0.0
  %462 = vmatpush1.msra.mxu0 0.0
  %463 = vmatprep.subr.mxu0 0.0
  %464 = vmatpush1.msra.mxu0 0.0
  %465 = vmatprep.subr.mxu0 0.0
  %466 = vmatpush1.msra.mxu0 0.0
  %467 = vmatprep.mubr.f32.mxu0 0.0
  %468 = vmatmul.mubr.f32.gmra.mrb[0].mxu0 %v401
  %v469 = vpop.f32.mrb[0].mxu0
  %v470 = vadd.f32 0.0, %v469
  %v471 = vpop.f32.mrb[0].mxu0
  %472 = vdwg.mxu0
  %s473 = scalar_lea.vmem %s7, 8
  %v474 = vld [vmem:[%s473] sm:$0xff]
  %475 = vrot.lane.b32.xlu0 %v135, 120
  %v476 = vpop.permute.xlu0 %475
  %477 = vrot.lane.b32.xlu0 %v135, 88
  %v478 = vpop.permute.xlu0 %477
  %v479 = vsel %vm147, %v476, 0
  %v481 = vsel %vm147, %v478, 0
  %483 = vmatprep.subr.mxu0 0.0
  %484 = vmatpush1.xpose.msra.mxu0 %v481
  %485 = vmatprep.subr.mxu0 0.0
  %486 = vmatpush1.xpose.msra.mxu0 0.0
  %487 = vmatprep.subr.mxu0 0.0
  %488 = vmatpush1.xpose.msra.mxu0 0.0
  %489 = vmatprep.subr.mxu0 0.0
  %490 = vmatpush1.xpose.msra.mxu0 0.0
  %491 = vmatprep.subr.mxu0 0.0
  %492 = vmatpush1.xpose.msra.mxu0 0.0
  %493 = vmatprep.subr.mxu0 0.0
  %494 = vmatpush1.xpose.msra.mxu0 0.0
  %495 = vmatprep.subr.mxu0 0.0
  %496 = vmatpush1.xpose.msra.mxu0 0.0
  %497 = vmatprep.subr.mxu0 0.0
  %498 = vmatpush1.xpose.msra.mxu0 0.0
  %499 = vmatprep.subr.mxu0 0.0
  %500 = vmatpush1.xpose.msra.mxu0 0.0
  %501 = vmatprep.subr.mxu0 0.0
  %502 = vmatpush1.xpose.msra.mxu0 0.0
  %503 = vmatprep.subr.mxu0 0.0
  %504 = vmatpush1.xpose.msra.mxu0 0.0
  %505 = vmatprep.subr.mxu0 0.0
  %506 = vmatpush1.xpose.msra.mxu0 0.0
  %507 = vmatprep.subr.mxu0 0.0
  %508 = vmatpush1.xpose.msra.mxu0 0.0
  %509 = vmatprep.subr.mxu0 0.0
  %510 = vmatpush1.xpose.msra.mxu0 0.0
  %511 = vmatprep.subr.mxu0 0.0
  %512 = vmatpush1.xpose.msra.mxu0 0.0
  %513 = vmatprep.subr.mxu0 0.0
  %514 = vmatpush1.xpose.msra.mxu0 0.0
  %515 = vmatprep.subr.mxu0 0.0
  %516 = vmatpush1.xpose.msra.mxu0 0.0
  %517 = vmatprep.subr.mxu0 0.0
  %518 = vmatpush1.xpose.msra.mxu0 0.0
  %519 = vmatprep.subr.mxu0 0.0
  %520 = vmatpush1.xpose.msra.mxu0 0.0
  %521 = vmatprep.subr.mxu0 0.0
  %522 = vmatpush1.xpose.msra.mxu0 0.0
  %523 = vmatprep.subr.mxu0 0.0
  %524 = vmatpush1.xpose.msra.mxu0 0.0
  %525 = vmatprep.subr.mxu0 0.0
  %526 = vmatpush1.xpose.msra.mxu0 0.0
  %527 = vmatprep.subr.mxu0 0.0
  %528 = vmatpush1.xpose.msra.mxu0 0.0
  %529 = vmatprep.subr.mxu0 0.0
  %530 = vmatpush1.xpose.msra.mxu0 0.0
  %531 = vmatprep.subr.mxu0 0.0
  %532 = vmatpush1.xpose.msra.mxu0 0.0
  %533 = vmatprep.subr.mxu0 0.0
  %534 = vmatpush1.xpose.msra.mxu0 0.0
  %535 = vmatprep.subr.mxu0 0.0
  %536 = vmatpush1.xpose.msra.mxu0 0.0
  %537 = vmatprep.subr.mxu0 0.0
  %538 = vmatpush1.xpose.msra.mxu0 0.0
  %539 = vmatprep.subr.mxu0 0.0
  %540 = vmatpush1.xpose.msra.mxu0 0.0
  %541 = vmatprep.subr.mxu0 0.0
  %542 = vmatpush1.xpose.msra.mxu0 0.0
  %543 = vmatprep.subr.mxu0 0.0
  %544 = vmatpush1.xpose.msra.mxu0 0.0
  %545 = vmatprep.subr.mxu0 0.0
  %546 = vmatpush1.xpose.msra.mxu0 0.0
  %547 = vmatprep.mubr.f32.mxu0 0.0
  %548 = vmatmul.mubr.f32.gmra.mrb[0].mxu0 %v479
  %v549 = vpop.f32.mrb[0].mxu0
  %v550 = vadd.f32 %v474, %v549
  %v551 = vpop.f32.mrb[0].mxu0
  %552 = vdwg.mxu0
  %553 = vrot.lane.b32.xlu0 %v140, 120
  %v554 = vpop.permute.xlu0 %553
  %555 = vrot.lane.b32.xlu0 %v140, 88
  %v556 = vpop.permute.xlu0 %555
  %v557 = vsel %vm147, %v554, 0
  %v559 = vsel %vm147, %v556, 0
  %561 = vmatprep.subr.mxu0 0.0
  %562 = vmatpush1.xpose.msra.mxu0 %v559
  %563 = vmatprep.subr.mxu0 0.0
  %564 = vmatpush1.xpose.msra.mxu0 0.0
  %565 = vmatprep.subr.mxu0 0.0
  %566 = vmatpush1.xpose.msra.mxu0 0.0
  %567 = vmatprep.subr.mxu0 0.0
  %568 = vmatpush1.xpose.msra.mxu0 0.0
  %569 = vmatprep.subr.mxu0 0.0
  %570 = vmatpush1.xpose.msra.mxu0 0.0
  %571 = vmatprep.subr.mxu0 0.0
  %572 = vmatpush1.xpose.msra.mxu0 0.0
  %573 = vmatprep.subr.mxu0 0.0
  %574 = vmatpush1.xpose.msra.mxu0 0.0
  %575 = vmatprep.subr.mxu0 0.0
  %576 = vmatpush1.xpose.msra.mxu0 0.0
  %577 = vmatprep.subr.mxu0 0.0
  %578 = vmatpush1.xpose.msra.mxu0 0.0
  %579 = vmatprep.subr.mxu0 0.0
  %580 = vmatpush1.xpose.msra.mxu0 0.0
  %581 = vmatprep.subr.mxu0 0.0
  %582 = vmatpush1.xpose.msra.mxu0 0.0
  %583 = vmatprep.subr.mxu0 0.0
  %584 = vmatpush1.xpose.msra.mxu0 0.0
  %585 = vmatprep.subr.mxu0 0.0
  %586 = vmatpush1.xpose.msra.mxu0 0.0
  %587 = vmatprep.subr.mxu0 0.0
  %588 = vmatpush1.xpose.msra.mxu0 0.0
  %589 = vmatprep.subr.mxu0 0.0
  %590 = vmatpush1.xpose.msra.mxu0 0.0
  %591 = vmatprep.subr.mxu0 0.0
  %592 = vmatpush1.xpose.msra.mxu0 0.0
  %593 = vmatprep.subr.mxu0 0.0
  %594 = vmatpush1.xpose.msra.mxu0 0.0
  %595 = vmatprep.subr.mxu0 0.0
  %596 = vmatpush1.xpose.msra.mxu0 0.0
  %597 = vmatprep.subr.mxu0 0.0
  %598 = vmatpush1.xpose.msra.mxu0 0.0
  %599 = vmatprep.subr.mxu0 0.0
  %600 = vmatpush1.xpose.msra.mxu0 0.0
  %601 = vmatprep.subr.mxu0 0.0
  %602 = vmatpush1.xpose.msra.mxu0 0.0
  %603 = vmatprep.subr.mxu0 0.0
  %604 = vmatpush1.xpose.msra.mxu0 0.0
  %605 = vmatprep.subr.mxu0 0.0
  %606 = vmatpush1.xpose.msra.mxu0 0.0
  %607 = vmatprep.subr.mxu0 0.0
  %608 = vmatpush1.xpose.msra.mxu0 0.0
  %609 = vmatprep.subr.mxu0 0.0
  %610 = vmatpush1.xpose.msra.mxu0 0.0
  %611 = vmatprep.subr.mxu0 0.0
  %612 = vmatpush1.xpose.msra.mxu0 0.0
  %613 = vmatprep.subr.mxu0 0.0
  %614 = vmatpush1.xpose.msra.mxu0 0.0
  %615 = vmatprep.subr.mxu0 0.0
  %616 = vmatpush1.xpose.msra.mxu0 0.0
  %617 = vmatprep.subr.mxu0 0.0
  %618 = vmatpush1.xpose.msra.mxu0 0.0
  %619 = vmatprep.subr.mxu0 0.0
  %620 = vmatpush1.xpose.msra.mxu0 0.0
  %621 = vmatprep.subr.mxu0 0.0
  %622 = vmatpush1.xpose.msra.mxu0 0.0
  %623 = vmatprep.subr.mxu0 0.0
  %624 = vmatpush1.xpose.msra.mxu0 0.0
  %625 = vmatprep.mubr.f32.mxu0 0.0
  %626 = vmatmul.mubr.f32.gmra.mrb[0].mxu0 %v557
  %v627 = vpop.f32.mrb[0].mxu0
  %v628 = vadd.f32 %v474, %v627
  %v629 = vpop.f32.mrb[0].mxu0
  %630 = vdwg.mxu0
  %v631 = vsel %vm147, %v550, -inf
  %632 = vmax.xlane.f32.xlu0 %v631
  %v633 = vpop.xlane.xlu0 %632
  %v634 = vsel %vm147, %v628, -inf
  %635 = vmax.xlane.f32.xlu0 %v634
  %v636 = vpop.xlane.xlu0 %635
  %v637 = vsub.f32 %v550, %v633
  %v638 = vsub.f32 %v628, %v636
  %v639 = vmul.f32 %v637, 1.442695
  %v640 = vpow.pop %v639
  %v641 = vmul.f32 %v638, 1.442695
  %v642 = vpow.pop %v641
  %v643 = vsel %vm147, %v640, 0.0
  %644 = vadd.xlane.f32.xlu0 %v643
  %v645 = vpop.xlane.xlu0 %644
  %v646 = vsel %vm147, %v642, 0.0
  %647 = vadd.xlane.f32.xlu0 %v646
  %v648 = vpop.xlane.xlu0 %647
  %v649 = vrcp.pop %v645
  %v650 = vrcp.pop %v648
  %v651 = vmul.f32 %v640, %v649
  %v652 = vmul.f32 %v642, %v650
  %653 = vrot.lane.b32.xlu0 %v135, 56
  %v654 = vpop.permute.xlu0 %653
  %v657 = vsel %vm147, %v651, 0
  %659 = vmatprep.subr.mxu0 0.0
  %660 = vmatpush1.msra.mxu0 %v654
  %661 = vmatprep.subr.mxu0 0.0
  %662 = vmatpush1.msra.mxu0 0.0
  %663 = vmatprep.subr.mxu0 0.0
  %664 = vmatpush1.msra.mxu0 0.0
  %665 = vmatprep.subr.mxu0 0.0
  %666 = vmatpush1.msra.mxu0 0.0
  %667 = vmatprep.subr.mxu0 0.0
  %668 = vmatpush1.msra.mxu0 0.0
  %669 = vmatprep.subr.mxu0 0.0
  %670 = vmatpush1.msra.mxu0 0.0
  %671 = vmatprep.subr.mxu0 0.0
  %672 = vmatpush1.msra.mxu0 0.0
  %673 = vmatprep.subr.mxu0 0.0
  %674 = vmatpush1.msra.mxu0 0.0
  %675 = vmatprep.subr.mxu0 0.0
  %676 = vmatpush1.msra.mxu0 0.0
  %677 = vmatprep.subr.mxu0 0.0
  %678 = vmatpush1.msra.mxu0 0.0
  %679 = vmatprep.subr.mxu0 0.0
  %680 = vmatpush1.msra.mxu0 0.0
  %681 = vmatprep.subr.mxu0 0.0
  %682 = vmatpush1.msra.mxu0 0.0
  %683 = vmatprep.subr.mxu0 0.0
  %684 = vmatpush1.msra.mxu0 0.0
  %685 = vmatprep.subr.mxu0 0.0
  %686 = vmatpush1.msra.mxu0 0.0
  %687 = vmatprep.subr.mxu0 0.0
  %688 = vmatpush1.msra.mxu0 0.0
  %689 = vmatprep.subr.mxu0 0.0
  %690 = vmatpush1.msra.mxu0 0.0
  %691 = vmatprep.subr.mxu0 0.0
  %692 = vmatpush1.msra.mxu0 0.0
  %693 = vmatprep.subr.mxu0 0.0
  %694 = vmatpush1.msra.mxu0 0.0
  %695 = vmatprep.subr.mxu0 0.0
  %696 = vmatpush1.msra.mxu0 0.0
  %697 = vmatprep.subr.mxu0 0.0
  %698 = vmatpush1.msra.mxu0 0.0
  %699 = vmatprep.subr.mxu0 0.0
  %700 = vmatpush1.msra.mxu0 0.0
  %701 = vmatprep.subr.mxu0 0.0
  %702 = vmatpush1.msra.mxu0 0.0
  %703 = vmatprep.subr.mxu0 0.0
  %704 = vmatpush1.msra.mxu0 0.0
  %705 = vmatprep.subr.mxu0 0.0
  %706 = vmatpush1.msra.mxu0 0.0
  %707 = vmatprep.subr.mxu0 0.0
  %708 = vmatpush1.msra.mxu0 0.0
  %709 = vmatprep.subr.mxu0 0.0
  %710 = vmatpush1.msra.mxu0 0.0
  %711 = vmatprep.subr.mxu0 0.0
  %712 = vmatpush1.msra.mxu0 0.0
  %713 = vmatprep.subr.mxu0 0.0
  %714 = vmatpush1.msra.mxu0 0.0
  %715 = vmatprep.subr.mxu0 0.0
  %716 = vmatpush1.msra.mxu0 0.0
  %717 = vmatprep.subr.mxu0 0.0
  %718 = vmatpush1.msra.mxu0 0.0
  %719 = vmatprep.subr.mxu0 0.0
  %720 = vmatpush1.msra.mxu0 0.0
  %721 = vmatprep.subr.mxu0 0.0
  %722 = vmatpush1.msra.mxu0 0.0
  %723 = vmatprep.mubr.f32.mxu0 0.0
  %724 = vmatmul.mubr.f32.gmra.mrb[0].mxu0 %v657
  %v725 = vpop.f32.mrb[0].mxu0
  %v726 = vadd.f32 0.0, %v725
  %v727 = vpop.f32.mrb[0].mxu0
  %728 = vdwg.mxu0
  %729 = vrot.lane.b32.xlu0 %v140, 56
  %v730 = vpop.permute.xlu0 %729
  %v733 = vsel %vm147, %v652, 0
  %735 = vmatprep.subr.mxu0 0.0
  %736 = vmatpush1.msra.mxu0 %v730
  %737 = vmatprep.subr.mxu0 0.0
  %738 = vmatpush1.msra.mxu0 0.0
  %739 = vmatprep.subr.mxu0 0.0
  %740 = vmatpush1.msra.mxu0 0.0
  %741 = vmatprep.subr.mxu0 0.0
  %742 = vmatpush1.msra.mxu0 0.0
  %743 = vmatprep.subr.mxu0 0.0
  %744 = vmatpush1.msra.mxu0 0.0
  %745 = vmatprep.subr.mxu0 0.0
  %746 = vmatpush1.msra.mxu0 0.0
  %747 = vmatprep.subr.mxu0 0.0
  %748 = vmatpush1.msra.mxu0 0.0
  %749 = vmatprep.subr.mxu0 0.0
  %750 = vmatpush1.msra.mxu0 0.0
  %751 = vmatprep.subr.mxu0 0.0
  %752 = vmatpush1.msra.mxu0 0.0
  %753 = vmatprep.subr.mxu0 0.0
  %754 = vmatpush1.msra.mxu0 0.0
  %755 = vmatprep.subr.mxu0 0.0
  %756 = vmatpush1.msra.mxu0 0.0
  %757 = vmatprep.subr.mxu0 0.0
  %758 = vmatpush1.msra.mxu0 0.0
  %759 = vmatprep.subr.mxu0 0.0
  %760 = vmatpush1.msra.mxu0 0.0
  %761 = vmatprep.subr.mxu0 0.0
  %762 = vmatpush1.msra.mxu0 0.0
  %763 = vmatprep.subr.mxu0 0.0
  %764 = vmatpush1.msra.mxu0 0.0
  %765 = vmatprep.subr.mxu0 0.0
  %766 = vmatpush1.msra.mxu0 0.0
  %767 = vmatprep.subr.mxu0 0.0
  %768 = vmatpush1.msra.mxu0 0.0
  %769 = vmatprep.subr.mxu0 0.0
  %770 = vmatpush1.msra.mxu0 0.0
  %771 = vmatprep.subr.mxu0 0.0
  %772 = vmatpush1.msra.mxu0 0.0
  %773 = vmatprep.subr.mxu0 0.0
  %774 = vmatpush1.msra.mxu0 0.0
  %775 = vmatprep.subr.mxu0 0.0
  %776 = vmatpush1.msra.mxu0 0.0
  %777 = vmatprep.subr.mxu0 0.0
  %778 = vmatpush1.msra.mxu0 0.0
  %779 = vmatprep.subr.mxu0 0.0
  %780 = vmatpush1.msra.mxu0 0.0
  %781 = vmatprep.subr.mxu0 0.0
  %782 = vmatpush1.msra.mxu0 0.0
  %783 = vmatprep.subr.mxu0 0.0
  %784 = vmatpush1.msra.mxu0 0.0
  %785 = vmatprep.subr.mxu0 0.0
  %786 = vmatpush1.msra.mxu0 0.0
  %787 = vmatprep.subr.mxu0 0.0
  %788 = vmatpush1.msra.mxu0 0.0
  %789 = vmatprep.subr.mxu0 0.0
  %790 = vmatpush1.msra.mxu0 0.0
  %791 = vmatprep.subr.mxu0 0.0
  %792 = vmatpush1.msra.mxu0 0.0
  %793 = vmatprep.subr.mxu0 0.0
  %794 = vmatpush1.msra.mxu0 0.0
  %795 = vmatprep.subr.mxu0 0.0
  %796 = vmatpush1.msra.mxu0 0.0
  %797 = vmatprep.subr.mxu0 0.0
  %798 = vmatpush1.msra.mxu0 0.0
  %799 = vmatprep.mubr.f32.mxu0 0.0
  %800 = vmatmul.mubr.f32.gmra.mrb[0].mxu0 %v733
  %v801 = vpop.f32.mrb[0].mxu0
  %v802 = vadd.f32 0.0, %v801
  %v803 = vpop.f32.mrb[0].mxu0
  %804 = vdwg.mxu0
  %s805 = scalar_lea.vmem %s7, 16
  %v806 = vld [vmem:[%s805] sm:$0xff]
  %807 = vrot.lane.b32.xlu0 %v135, 112
  %v808 = vpop.permute.xlu0 %807
  %809 = vrot.lane.b32.xlu0 %v135, 80
  %v810 = vpop.permute.xlu0 %809
  %v811 = vsel %vm147, %v808, 0
  %v813 = vsel %vm147, %v810, 0
  %815 = vmatprep.subr.mxu0 0.0
  %816 = vmatpush1.xpose.msra.mxu0 %v813
  %817 = vmatprep.subr.mxu0 0.0
  %818 = vmatpush1.xpose.msra.mxu0 0.0
  %819 = vmatprep.subr.mxu0 0.0
  %820 = vmatpush1.xpose.msra.mxu0 0.0
  %821 = vmatprep.subr.mxu0 0.0
  %822 = vmatpush1.xpose.msra.mxu0 0.0
  %823 = vmatprep.subr.mxu0 0.0
  %824 = vmatpush1.xpose.msra.mxu0 0.0
  %825 = vmatprep.subr.mxu0 0.0
  %826 = vmatpush1.xpose.msra.mxu0 0.0
  %827 = vmatprep.subr.mxu0 0.0
  %828 = vmatpush1.xpose.msra.mxu0 0.0
  %829 = vmatprep.subr.mxu0 0.0
  %830 = vmatpush1.xpose.msra.mxu0 0.0
  %831 = vmatprep.subr.mxu0 0.0
  %832 = vmatpush1.xpose.msra.mxu0 0.0
  %833 = vmatprep.subr.mxu0 0.0
  %834 = vmatpush1.xpose.msra.mxu0 0.0
  %835 = vmatprep.subr.mxu0 0.0
  %836 = vmatpush1.xpose.msra.mxu0 0.0
  %837 = vmatprep.subr.mxu0 0.0
  %838 = vmatpush1.xpose.msra.mxu0 0.0
  %839 = vmatprep.subr.mxu0 0.0
  %840 = vmatpush1.xpose.msra.mxu0 0.0
  %841 = vmatprep.subr.mxu0 0.0
  %842 = vmatpush1.xpose.msra.mxu0 0.0
  %843 = vmatprep.subr.mxu0 0.0
  %844 = vmatpush1.xpose.msra.mxu0 0.0
  %845 = vmatprep.subr.mxu0 0.0
  %846 = vmatpush1.xpose.msra.mxu0 0.0
  %847 = vmatprep.subr.mxu0 0.0
  %848 = vmatpush1.xpose.msra.mxu0 0.0
  %849 = vmatprep.subr.mxu0 0.0
  %850 = vmatpush1.xpose.msra.mxu0 0.0
  %851 = vmatprep.subr.mxu0 0.0
  %852 = vmatpush1.xpose.msra.mxu0 0.0
  %853 = vmatprep.subr.mxu0 0.0
  %854 = vmatpush1.xpose.msra.mxu0 0.0
  %855 = vmatprep.subr.mxu0 0.0
  %856 = vmatpush1.xpose.msra.mxu0 0.0
  %857 = vmatprep.subr.mxu0 0.0
  %858 = vmatpush1.xpose.msra.mxu0 0.0
  %859 = vmatprep.subr.mxu0 0.0
  %860 = vmatpush1.xpose.msra.mxu0 0.0
  %861 = vmatprep.subr.mxu0 0.0
  %862 = vmatpush1.xpose.msra.mxu0 0.0
  %863 = vmatprep.subr.mxu0 0.0
  %864 = vmatpush1.xpose.msra.mxu0 0.0
  %865 = vmatprep.subr.mxu0 0.0
  %866 = vmatpush1.xpose.msra.mxu0 0.0
  %867 = vmatprep.subr.mxu0 0.0
  %868 = vmatpush1.xpose.msra.mxu0 0.0
  %869 = vmatprep.subr.mxu0 0.0
  %870 = vmatpush1.xpose.msra.mxu0 0.0
  %871 = vmatprep.subr.mxu0 0.0
  %872 = vmatpush1.xpose.msra.mxu0 0.0
  %873 = vmatprep.subr.mxu0 0.0
  %874 = vmatpush1.xpose.msra.mxu0 0.0
  %875 = vmatprep.subr.mxu0 0.0
  %876 = vmatpush1.xpose.msra.mxu0 0.0
  %877 = vmatprep.subr.mxu0 0.0
  %878 = vmatpush1.xpose.msra.mxu0 0.0
  %879 = vmatprep.mubr.f32.mxu0 0.0
  %880 = vmatmul.mubr.f32.gmra.mrb[0].mxu0 %v811
  %v881 = vpop.f32.mrb[0].mxu0
  %v882 = vadd.f32 %v806, %v881
  %v883 = vpop.f32.mrb[0].mxu0
  %884 = vdwg.mxu0
  %885 = vrot.lane.b32.xlu0 %v140, 112
  %v886 = vpop.permute.xlu0 %885
  %887 = vrot.lane.b32.xlu0 %v140, 80
  %v888 = vpop.permute.xlu0 %887
  %v889 = vsel %vm147, %v886, 0
  %v891 = vsel %vm147, %v888, 0
  %893 = vmatprep.subr.mxu0 0.0
  %894 = vmatpush1.xpose.msra.mxu0 %v891
  %895 = vmatprep.subr.mxu0 0.0
  %896 = vmatpush1.xpose.msra.mxu0 0.0
  %897 = vmatprep.subr.mxu0 0.0
  %898 = vmatpush1.xpose.msra.mxu0 0.0
  %899 = vmatprep.subr.mxu0 0.0
  %900 = vmatpush1.xpose.msra.mxu0 0.0
  %901 = vmatprep.subr.mxu0 0.0
  %902 = vmatpush1.xpose.msra.mxu0 0.0
  %903 = vmatprep.subr.mxu0 0.0
  %904 = vmatpush1.xpose.msra.mxu0 0.0
  %905 = vmatprep.subr.mxu0 0.0
  %906 = vmatpush1.xpose.msra.mxu0 0.0
  %907 = vmatprep.subr.mxu0 0.0
  %908 = vmatpush1.xpose.msra.mxu0 0.0
  %909 = vmatprep.subr.mxu0 0.0
  %910 = vmatpush1.xpose.msra.mxu0 0.0
  %911 = vmatprep.subr.mxu0 0.0
  %912 = vmatpush1.xpose.msra.mxu0 0.0
  %913 = vmatprep.subr.mxu0 0.0
  %914 = vmatpush1.xpose.msra.mxu0 0.0
  %915 = vmatprep.subr.mxu0 0.0
  %916 = vmatpush1.xpose.msra.mxu0 0.0
  %917 = vmatprep.subr.mxu0 0.0
  %918 = vmatpush1.xpose.msra.mxu0 0.0
  %919 = vmatprep.subr.mxu0 0.0
  %920 = vmatpush1.xpose.msra.mxu0 0.0
  %921 = vmatprep.subr.mxu0 0.0
  %922 = vmatpush1.xpose.msra.mxu0 0.0
  %923 = vmatprep.subr.mxu0 0.0
  %924 = vmatpush1.xpose.msra.mxu0 0.0
  %925 = vmatprep.subr.mxu0 0.0
  %926 = vmatpush1.xpose.msra.mxu0 0.0
  %927 = vmatprep.subr.mxu0 0.0
  %928 = vmatpush1.xpose.msra.mxu0 0.0
  %929 = vmatprep.subr.mxu0 0.0
  %930 = vmatpush1.xpose.msra.mxu0 0.0
  %931 = vmatprep.subr.mxu0 0.0
  %932 = vmatpush1.xpose.msra.mxu0 0.0
  %933 = vmatprep.subr.mxu0 0.0
  %934 = vmatpush1.xpose.msra.mxu0 0.0
  %935 = vmatprep.subr.mxu0 0.0
  %936 = vmatpush1.xpose.msra.mxu0 0.0
  %937 = vmatprep.subr.mxu0 0.0
  %938 = vmatpush1.xpose.msra.mxu0 0.0
  %939 = vmatprep.subr.mxu0 0.0
  %940 = vmatpush1.xpose.msra.mxu0 0.0
  %941 = vmatprep.subr.mxu0 0.0
  %942 = vmatpush1.xpose.msra.mxu0 0.0
  %943 = vmatprep.subr.mxu0 0.0
  %944 = vmatpush1.xpose.msra.mxu0 0.0
  %945 = vmatprep.subr.mxu0 0.0
  %946 = vmatpush1.xpose.msra.mxu0 0.0
  %947 = vmatprep.subr.mxu0 0.0
  %948 = vmatpush1.xpose.msra.mxu0 0.0
  %949 = vmatprep.subr.mxu0 0.0
  %950 = vmatpush1.xpose.msra.mxu0 0.0
  %951 = vmatprep.subr.mxu0 0.0
  %952 = vmatpush1.xpose.msra.mxu0 0.0
  %953 = vmatprep.subr.mxu0 0.0
  %954 = vmatpush1.xpose.msra.mxu0 0.0
  %955 = vmatprep.subr.mxu0 0.0
  %956 = vmatpush1.xpose.msra.mxu0 0.0
  %957 = vmatprep.mubr.f32.mxu0 0.0
  %958 = vmatmul.mubr.f32.gmra.mrb[0].mxu0 %v889
  %v959 = vpop.f32.mrb[0].mxu0
  %v960 = vadd.f32 %v806, %v959
  %v961 = vpop.f32.mrb[0].mxu0
  %962 = vdwg.mxu0
  %v963 = vsel %vm147, %v882, -inf
  %964 = vmax.xlane.f32.xlu0 %v963
  %v965 = vpop.xlane.xlu0 %964
  %v966 = vsel %vm147, %v960, -inf
  %967 = vmax.xlane.f32.xlu0 %v966
  %v968 = vpop.xlane.xlu0 %967
  %v969 = vsub.f32 %v882, %v965
  %v970 = vsub.f32 %v960, %v968
  %v971 = vmul.f32 %v969, 1.442695
  %v972 = vpow.pop %v971
  %v973 = vmul.f32 %v970, 1.442695
  %v974 = vpow.pop %v973
  %v975 = vsel %vm147, %v972, 0.0
  %976 = vadd.xlane.f32.xlu0 %v975
  %v977 = vpop.xlane.xlu0 %976
  %v978 = vsel %vm147, %v974, 0.0
  %979 = vadd.xlane.f32.xlu0 %v978
  %v980 = vpop.xlane.xlu0 %979
  %v981 = vrcp.pop %v977
  %v982 = vrcp.pop %v980
  %v983 = vmul.f32 %v972, %v981
  %v984 = vmul.f32 %v974, %v982
  %985 = vrot.lane.b32.xlu0 %v135, 48
  %v986 = vpop.permute.xlu0 %985
  %v989 = vsel %vm147, %v983, 0
  %991 = vmatprep.subr.mxu0 0.0
  %992 = vmatpush1.msra.mxu0 %v986
  %993 = vmatprep.subr.mxu0 0.0
  %994 = vmatpush1.msra.mxu0 0.0
  %995 = vmatprep.subr.mxu0 0.0
  %996 = vmatpush1.msra.mxu0 0.0
  %997 = vmatprep.subr.mxu0 0.0
  %998 = vmatpush1.msra.mxu0 0.0
  %999 = vmatprep.subr.mxu0 0.0
  %1000 = vmatpush1.msra.mxu0 0.0
  %1001 = vmatprep.subr.mxu0 0.0
  %1002 = vmatpush1.msra.mxu0 0.0
  %1003 = vmatprep.subr.mxu0 0.0
  %1004 = vmatpush1.msra.mxu0 0.0
  %1005 = vmatprep.subr.mxu0 0.0
  %1006 = vmatpush1.msra.mxu0 0.0
  %1007 = vmatprep.subr.mxu0 0.0
  %1008 = vmatpush1.msra.mxu0 0.0
  %1009 = vmatprep.subr.mxu0 0.0
  %1010 = vmatpush1.msra.mxu0 0.0
  %1011 = vmatprep.subr.mxu0 0.0
  %1012 = vmatpush1.msra.mxu0 0.0
  %1013 = vmatprep.subr.mxu0 0.0
  %1014 = vmatpush1.msra.mxu0 0.0
  %1015 = vmatprep.subr.mxu0 0.0
  %1016 = vmatpush1.msra.mxu0 0.0
  %1017 = vmatprep.subr.mxu0 0.0
  %1018 = vmatpush1.msra.mxu0 0.0
  %1019 = vmatprep.subr.mxu0 0.0
  %1020 = vmatpush1.msra.mxu0 0.0
  %1021 = vmatprep.subr.mxu0 0.0
  %1022 = vmatpush1.msra.mxu0 0.0
  %1023 = vmatprep.subr.mxu0 0.0
  %1024 = vmatpush1.msra.mxu0 0.0
  %1025 = vmatprep.subr.mxu0 0.0
  %1026 = vmatpush1.msra.mxu0 0.0
  %1027 = vmatprep.subr.mxu0 0.0
  %1028 = vmatpush1.msra.mxu0 0.0
  %1029 = vmatprep.subr.mxu0 0.0
  %1030 = vmatpush1.msra.mxu0 0.0
  %1031 = vmatprep.subr.mxu0 0.0
  %1032 = vmatpush1.msra.mxu0 0.0
  %1033 = vmatprep.subr.mxu0 0.0
  %1034 = vmatpush1.msra.mxu0 0.0
  %1035 = vmatprep.subr.mxu0 0.0
  %1036 = vmatpush1.msra.mxu0 0.0
  %1037 = vmatprep.subr.mxu0 0.0
  %1038 = vmatpush1.msra.mxu0 0.0
  %1039 = vmatprep.subr.mxu0 0.0
  %1040 = vmatpush1.msra.mxu0 0.0
  %1041 = vmatprep.subr.mxu0 0.0
  %1042 = vmatpush1.msra.mxu0 0.0
  %1043 = vmatprep.subr.mxu0 0.0
  %1044 = vmatpush1.msra.mxu0 0.0
  %1045 = vmatprep.subr.mxu0 0.0
  %1046 = vmatpush1.msra.mxu0 0.0
  %1047 = vmatprep.subr.mxu0 0.0
  %1048 = vmatpush1.msra.mxu0 0.0
  %1049 = vmatprep.subr.mxu0 0.0
  %1050 = vmatpush1.msra.mxu0 0.0
  %1051 = vmatprep.subr.mxu0 0.0
  %1052 = vmatpush1.msra.mxu0 0.0
  %1053 = vmatprep.subr.mxu0 0.0
  %1054 = vmatpush1.msra.mxu0 0.0
  %1055 = vmatprep.mubr.f32.mxu0 0.0
  %1056 = vmatmul.mubr.f32.gmra.mrb[0].mxu0 %v989
  %v1057 = vpop.f32.mrb[0].mxu0
  %v1058 = vadd.f32 0.0, %v1057
  %v1059 = vpop.f32.mrb[0].mxu0
  %1060 = vdwg.mxu0
  %1061 = vrot.lane.b32.xlu0 %v140, 48
  %v1062 = vpop.permute.xlu0 %1061
  %v1065 = vsel %vm147, %v984, 0
  %1067 = vmatprep.subr.mxu0 0.0
  %1068 = vmatpush1.msra.mxu0 %v1062
  %1069 = vmatprep.subr.mxu0 0.0
  %1070 = vmatpush1.msra.mxu0 0.0
  %1071 = vmatprep.subr.mxu0 0.0
  %1072 = vmatpush1.msra.mxu0 0.0
  %1073 = vmatprep.subr.mxu0 0.0
  %1074 = vmatpush1.msra.mxu0 0.0
  %1075 = vmatprep.subr.mxu0 0.0
  %1076 = vmatpush1.msra.mxu0 0.0
  %1077 = vmatprep.subr.mxu0 0.0
  %1078 = vmatpush1.msra.mxu0 0.0
  %1079 = vmatprep.subr.mxu0 0.0
  %1080 = vmatpush1.msra.mxu0 0.0
  %1081 = vmatprep.subr.mxu0 0.0
  %1082 = vmatpush1.msra.mxu0 0.0
  %1083 = vmatprep.subr.mxu0 0.0
  %1084 = vmatpush1.msra.mxu0 0.0
  %1085 = vmatprep.subr.mxu0 0.0
  %1086 = vmatpush1.msra.mxu0 0.0
  %1087 = vmatprep.subr.mxu0 0.0
  %1088 = vmatpush1.msra.mxu0 0.0
  %1089 = vmatprep.subr.mxu0 0.0
  %1090 = vmatpush1.msra.mxu0 0.0
  %1091 = vmatprep.subr.mxu0 0.0
  %1092 = vmatpush1.msra.mxu0 0.0
  %1093 = vmatprep.subr.mxu0 0.0
  %1094 = vmatpush1.msra.mxu0 0.0
  %1095 = vmatprep.subr.mxu0 0.0
  %1096 = vmatpush1.msra.mxu0 0.0
  %1097 = vmatprep.subr.mxu0 0.0
  %1098 = vmatpush1.msra.mxu0 0.0
  %1099 = vmatprep.subr.mxu0 0.0
  %1100 = vmatpush1.msra.mxu0 0.0
  %1101 = vmatprep.subr.mxu0 0.0
  %1102 = vmatpush1.msra.mxu0 0.0
  %1103 = vmatprep.subr.mxu0 0.0
  %1104 = vmatpush1.msra.mxu0 0.0
  %1105 = vmatprep.subr.mxu0 0.0
  %1106 = vmatpush1.msra.mxu0 0.0
  %1107 = vmatprep.subr.mxu0 0.0
  %1108 = vmatpush1.msra.mxu0 0.0
  %1109 = vmatprep.subr.mxu0 0.0
  %1110 = vmatpush1.msra.mxu0 0.0
  %1111 = vmatprep.subr.mxu0 0.0
  %1112 = vmatpush1.msra.mxu0 0.0
  %1113 = vmatprep.subr.mxu0 0.0
  %1114 = vmatpush1.msra.mxu0 0.0
  %1115 = vmatprep.subr.mxu0 0.0
  %1116 = vmatpush1.msra.mxu0 0.0
  %1117 = vmatprep.subr.mxu0 0.0
  %1118 = vmatpush1.msra.mxu0 0.0
  %1119 = vmatprep.subr.mxu0 0.0
  %1120 = vmatpush1.msra.mxu0 0.0
  %1121 = vmatprep.subr.mxu0 0.0
  %1122 = vmatpush1.msra.mxu0 0.0
  %1123 = vmatprep.subr.mxu0 0.0
  %1124 = vmatpush1.msra.mxu0 0.0
  %1125 = vmatprep.subr.mxu0 0.0
  %1126 = vmatpush1.msra.mxu0 0.0
  %1127 = vmatprep.subr.mxu0 0.0
  %1128 = vmatpush1.msra.mxu0 0.0
  %1129 = vmatprep.subr.mxu0 0.0
  %1130 = vmatpush1.msra.mxu0 0.0
  %1131 = vmatprep.mubr.f32.mxu0 0.0
  %1132 = vmatmul.mubr.f32.gmra.mrb[0].mxu0 %v1065
  %v1133 = vpop.f32.mrb[0].mxu0
  %v1134 = vadd.f32 0.0, %v1133
  %v1135 = vpop.f32.mrb[0].mxu0
  %1136 = vdwg.mxu0
  %s1137 = scalar_lea.vmem %s7, 24
  %v1138 = vld [vmem:[%s1137] sm:$0xff]
  %1139 = vrot.lane.b32.xlu0 %v135, 104
  %v1140 = vpop.permute.xlu0 %1139
  %1141 = vrot.lane.b32.xlu0 %v135, 72
  %v1142 = vpop.permute.xlu0 %1141
  %v1143 = vsel %vm147, %v1140, 0
  %v1145 = vsel %vm147, %v1142, 0
  %1147 = vmatprep.subr.mxu0 0.0
  %1148 = vmatpush1.xpose.msra.mxu0 %v1145
  %1149 = vmatprep.subr.mxu0 0.0
  %1150 = vmatpush1.xpose.msra.mxu0 0.0
  %1151 = vmatprep.subr.mxu0 0.0
  %1152 = vmatpush1.xpose.msra.mxu0 0.0
  %1153 = vmatprep.subr.mxu0 0.0
  %1154 = vmatpush1.xpose.msra.mxu0 0.0
  %1155 = vmatprep.subr.mxu0 0.0
  %1156 = vmatpush1.xpose.msra.mxu0 0.0
  %1157 = vmatprep.subr.mxu0 0.0
  %1158 = vmatpush1.xpose.msra.mxu0 0.0
  %1159 = vmatprep.subr.mxu0 0.0
  %1160 = vmatpush1.xpose.msra.mxu0 0.0
  %1161 = vmatprep.subr.mxu0 0.0
  %1162 = vmatpush1.xpose.msra.mxu0 0.0
  %1163 = vmatprep.subr.mxu0 0.0
  %1164 = vmatpush1.xpose.msra.mxu0 0.0
  %1165 = vmatprep.subr.mxu0 0.0
  %1166 = vmatpush1.xpose.msra.mxu0 0.0
  %1167 = vmatprep.subr.mxu0 0.0
  %1168 = vmatpush1.xpose.msra.mxu0 0.0
  %1169 = vmatprep.subr.mxu0 0.0
  %1170 = vmatpush1.xpose.msra.mxu0 0.0
  %1171 = vmatprep.subr.mxu0 0.0
  %1172 = vmatpush1.xpose.msra.mxu0 0.0
  %1173 = vmatprep.subr.mxu0 0.0
  %1174 = vmatpush1.xpose.msra.mxu0 0.0
  %1175 = vmatprep.subr.mxu0 0.0
  %1176 = vmatpush1.xpose.msra.mxu0 0.0
  %1177 = vmatprep.subr.mxu0 0.0
  %1178 = vmatpush1.xpose.msra.mxu0 0.0
  %1179 = vmatprep.subr.mxu0 0.0
  %1180 = vmatpush1.xpose.msra.mxu0 0.0
  %1181 = vmatprep.subr.mxu0 0.0
  %1182 = vmatpush1.xpose.msra.mxu0 0.0
  %1183 = vmatprep.subr.mxu0 0.0
  %1184 = vmatpush1.xpose.msra.mxu0 0.0
  %1185 = vmatprep.subr.mxu0 0.0
  %1186 = vmatpush1.xpose.msra.mxu0 0.0
  %1187 = vmatprep.subr.mxu0 0.0
  %1188 = vmatpush1.xpose.msra.mxu0 0.0
  %1189 = vmatprep.subr.mxu0 0.0
  %1190 = vmatpush1.xpose.msra.mxu0 0.0
  %1191 = vmatprep.subr.mxu0 0.0
  %1192 = vmatpush1.xpose.msra.mxu0 0.0
  %1193 = vmatprep.subr.mxu0 0.0
  %1194 = vmatpush1.xpose.msra.mxu0 0.0
  %1195 = vmatprep.subr.mxu0 0.0
  %1196 = vmatpush1.xpose.msra.mxu0 0.0
  %1197 = vmatprep.subr.mxu0 0.0
  %1198 = vmatpush1.xpose.msra.mxu0 0.0
  %1199 = vmatprep.subr.mxu0 0.0
  %1200 = vmatpush1.xpose.msra.mxu0 0.0
  %1201 = vmatprep.subr.mxu0 0.0
  %1202 = vmatpush1.xpose.msra.mxu0 0.0
  %1203 = vmatprep.subr.mxu0 0.0
  %1204 = vmatpush1.xpose.msra.mxu0 0.0
  %1205 = vmatprep.subr.mxu0 0.0
  %1206 = vmatpush1.xpose.msra.mxu0 0.0
  %1207 = vmatprep.subr.mxu0 0.0
  %1208 = vmatpush1.xpose.msra.mxu0 0.0
  %1209 = vmatprep.subr.mxu0 0.0
  %1210 = vmatpush1.xpose.msra.mxu0 0.0
  %1211 = vmatprep.mubr.f32.mxu0 0.0
  %1212 = vmatmul.mubr.f32.gmra.mrb[0].mxu0 %v1143
  %v1213 = vpop.f32.mrb[0].mxu0
  %v1214 = vadd.f32 %v1138, %v1213
  %v1215 = vpop.f32.mrb[0].mxu0
  %1216 = vdwg.mxu0
  %1217 = vrot.lane.b32.xlu0 %v140, 104
  %v1218 = vpop.permute.xlu0 %1217
  %1219 = vrot.lane.b32.xlu0 %v140, 72
  %v1220 = vpop.permute.xlu0 %1219
  %v1221 = vsel %vm147, %v1218, 0
  %v1223 = vsel %vm147, %v1220, 0
  %1225 = vmatprep.subr.mxu0 0.0
  %1226 = vmatpush1.xpose.msra.mxu0 %v1223
  %1227 = vmatprep.subr.mxu0 0.0
  %1228 = vmatpush1.xpose.msra.mxu0 0.0
  %1229 = vmatprep.subr.mxu0 0.0
  %1230 = vmatpush1.xpose.msra.mxu0 0.0
  %1231 = vmatprep.subr.mxu0 0.0
  %1232 = vmatpush1.xpose.msra.mxu0 0.0
  %1233 = vmatprep.subr.mxu0 0.0
  %1234 = vmatpush1.xpose.msra.mxu0 0.0
  %1235 = vmatprep.subr.mxu0 0.0
  %1236 = vmatpush1.xpose.msra.mxu0 0.0
  %1237 = vmatprep.subr.mxu0 0.0
  %1238 = vmatpush1.xpose.msra.mxu0 0.0
  %1239 = vmatprep.subr.mxu0 0.0
  %1240 = vmatpush1.xpose.msra.mxu0 0.0
  %1241 = vmatprep.subr.mxu0 0.0
  %1242 = vmatpush1.xpose.msra.mxu0 0.0
  %1243 = vmatprep.subr.mxu0 0.0
  %1244 = vmatpush1.xpose.msra.mxu0 0.0
  %1245 = vmatprep.subr.mxu0 0.0
  %1246 = vmatpush1.xpose.msra.mxu0 0.0
  %1247 = vmatprep.subr.mxu0 0.0
  %1248 = vmatpush1.xpose.msra.mxu0 0.0
  %1249 = vmatprep.subr.mxu0 0.0
  %1250 = vmatpush1.xpose.msra.mxu0 0.0
  %1251 = vmatprep.subr.mxu0 0.0
  %1252 = vmatpush1.xpose.msra.mxu0 0.0
  %1253 = vmatprep.subr.mxu0 0.0
  %1254 = vmatpush1.xpose.msra.mxu0 0.0
  %1255 = vmatprep.subr.mxu0 0.0
  %1256 = vmatpush1.xpose.msra.mxu0 0.0
  %1257 = vmatprep.subr.mxu0 0.0
  %1258 = vmatpush1.xpose.msra.mxu0 0.0
  %1259 = vmatprep.subr.mxu0 0.0
  %1260 = vmatpush1.xpose.msra.mxu0 0.0
  %1261 = vmatprep.subr.mxu0 0.0
  %1262 = vmatpush1.xpose.msra.mxu0 0.0
  %1263 = vmatprep.subr.mxu0 0.0
  %1264 = vmatpush1.xpose.msra.mxu0 0.0
  %1265 = vmatprep.subr.mxu0 0.0
  %1266 = vmatpush1.xpose.msra.mxu0 0.0
  %1267 = vmatprep.subr.mxu0 0.0
  %1268 = vmatpush1.xpose.msra.mxu0 0.0
  %1269 = vmatprep.subr.mxu0 0.0
  %1270 = vmatpush1.xpose.msra.mxu0 0.0
  %1271 = vmatprep.subr.mxu0 0.0
  %1272 = vmatpush1.xpose.msra.mxu0 0.0
  %1273 = vmatprep.subr.mxu0 0.0
  %1274 = vmatpush1.xpose.msra.mxu0 0.0
  %1275 = vmatprep.subr.mxu0 0.0
  %1276 = vmatpush1.xpose.msra.mxu0 0.0
  %1277 = vmatprep.subr.mxu0 0.0
  %1278 = vmatpush1.xpose.msra.mxu0 0.0
  %1279 = vmatprep.subr.mxu0 0.0
  %1280 = vmatpush1.xpose.msra.mxu0 0.0
  %1281 = vmatprep.subr.mxu0 0.0
  %1282 = vmatpush1.xpose.msra.mxu0 0.0
  %1283 = vmatprep.subr.mxu0 0.0
  %1284 = vmatpush1.xpose.msra.mxu0 0.0
  %1285 = vmatprep.subr.mxu0 0.0
  %1286 = vmatpush1.xpose.msra.mxu0 0.0
  %1287 = vmatprep.subr.mxu0 0.0
  %1288 = vmatpush1.xpose.msra.mxu0 0.0
  %1289 = vmatprep.mubr.f32.mxu0 0.0
  %1290 = vmatmul.mubr.f32.gmra.mrb[0].mxu0 %v1221
  %v1291 = vpop.f32.mrb[0].mxu0
  %v1292 = vadd.f32 %v1138, %v1291
  %v1293 = vpop.f32.mrb[0].mxu0
  %1294 = vdwg.mxu0
  %v1295 = vsel %vm147, %v1214, -inf
  %1296 = vmax.xlane.f32.xlu0 %v1295
  %v1297 = vpop.xlane.xlu0 %1296
  %v1298 = vsel %vm147, %v1292, -inf
  %1299 = vmax.xlane.f32.xlu0 %v1298
  %v1300 = vpop.xlane.xlu0 %1299
  %v1301 = vsub.f32 %v1214, %v1297
  %v1302 = vsub.f32 %v1292, %v1300
  %v1303 = vmul.f32 %v1301, 1.442695
  %v1304 = vpow.pop %v1303
  %v1305 = vmul.f32 %v1302, 1.442695
  %v1306 = vpow.pop %v1305
  %v1307 = vsel %vm147, %v1304, 0.0
  %1308 = vadd.xlane.f32.xlu0 %v1307
  %v1309 = vpop.xlane.xlu0 %1308
  %v1310 = vsel %vm147, %v1306, 0.0
  %1311 = vadd.xlane.f32.xlu0 %v1310
  %v1312 = vpop.xlane.xlu0 %1311
  %v1313 = vrcp.pop %v1309
  %v1314 = vrcp.pop %v1312
  %v1315 = vmul.f32 %v1304, %v1313
  %v1316 = vmul.f32 %v1306, %v1314
  %1317 = vrot.lane.b32.xlu0 %v135, 40
  %v1318 = vpop.permute.xlu0 %1317
  %v1321 = vsel %vm147, %v1315, 0
  %1323 = vmatprep.subr.mxu0 0.0
  %1324 = vmatpush1.msra.mxu0 %v1318
  %1325 = vmatprep.subr.mxu0 0.0
  %1326 = vmatpush1.msra.mxu0 0.0
  %1327 = vmatprep.subr.mxu0 0.0
  %1328 = vmatpush1.msra.mxu0 0.0
  %1329 = vmatprep.subr.mxu0 0.0
  %1330 = vmatpush1.msra.mxu0 0.0
  %1331 = vmatprep.subr.mxu0 0.0
  %1332 = vmatpush1.msra.mxu0 0.0
  %1333 = vmatprep.subr.mxu0 0.0
  %1334 = vmatpush1.msra.mxu0 0.0
  %1335 = vmatprep.subr.mxu0 0.0
  %1336 = vmatpush1.msra.mxu0 0.0
  %1337 = vmatprep.subr.mxu0 0.0
  %1338 = vmatpush1.msra.mxu0 0.0
  %1339 = vmatprep.subr.mxu0 0.0
  %1340 = vmatpush1.msra.mxu0 0.0
  %1341 = vmatprep.subr.mxu0 0.0
  %1342 = vmatpush1.msra.mxu0 0.0
  %1343 = vmatprep.subr.mxu0 0.0
  %1344 = vmatpush1.msra.mxu0 0.0
  %1345 = vmatprep.subr.mxu0 0.0
  %1346 = vmatpush1.msra.mxu0 0.0
  %1347 = vmatprep.subr.mxu0 0.0
  %1348 = vmatpush1.msra.mxu0 0.0
  %1349 = vmatprep.subr.mxu0 0.0
  %1350 = vmatpush1.msra.mxu0 0.0
  %1351 = vmatprep.subr.mxu0 0.0
  %1352 = vmatpush1.msra.mxu0 0.0
  %1353 = vmatprep.subr.mxu0 0.0
  %1354 = vmatpush1.msra.mxu0 0.0
  %1355 = vmatprep.subr.mxu0 0.0
  %1356 = vmatpush1.msra.mxu0 0.0
  %1357 = vmatprep.subr.mxu0 0.0
  %1358 = vmatpush1.msra.mxu0 0.0
  %1359 = vmatprep.subr.mxu0 0.0
  %1360 = vmatpush1.msra.mxu0 0.0
  %1361 = vmatprep.subr.mxu0 0.0
  %1362 = vmatpush1.msra.mxu0 0.0
  %1363 = vmatprep.subr.mxu0 0.0
  %1364 = vmatpush1.msra.mxu0 0.0
  %1365 = vmatprep.subr.mxu0 0.0
  %1366 = vmatpush1.msra.mxu0 0.0
  %1367 = vmatprep.subr.mxu0 0.0
  %1368 = vmatpush1.msra.mxu0 0.0
  %1369 = vmatprep.subr.mxu0 0.0
  %1370 = vmatpush1.msra.mxu0 0.0
  %1371 = vmatprep.subr.mxu0 0.0
  %1372 = vmatpush1.msra.mxu0 0.0
  %1373 = vmatprep.subr.mxu0 0.0
  %1374 = vmatpush1.msra.mxu0 0.0
  %1375 = vmatprep.subr.mxu0 0.0
  %1376 = vmatpush1.msra.mxu0 0.0
  %1377 = vmatprep.subr.mxu0 0.0
  %1378 = vmatpush1.msra.mxu0 0.0
  %1379 = vmatprep.subr.mxu0 0.0
  %1380 = vmatpush1.msra.mxu0 0.0
  %1381 = vmatprep.subr.mxu0 0.0
  %1382 = vmatpush1.msra.mxu0 0.0
  %1383 = vmatprep.subr.mxu0 0.0
  %1384 = vmatpush1.msra.mxu0 0.0
  %1385 = vmatprep.subr.mxu0 0.0
  %1386 = vmatpush1.msra.mxu0 0.0
  %1387 = vmatprep.mubr.f32.mxu0 0.0
  %1388 = vmatmul.mubr.f32.gmra.mrb[0].mxu0 %v1321
  %v1389 = vpop.f32.mrb[0].mxu0
  %v1390 = vadd.f32 0.0, %v1389
  %v1391 = vpop.f32.mrb[0].mxu0
  %1392 = vdwg.mxu0
  %1393 = vrot.lane.b32.xlu0 %v140, 40
  %v1394 = vpop.permute.xlu0 %1393
  %v1397 = vsel %vm147, %v1316, 0
  %1399 = vmatprep.subr.mxu0 0.0
  %1400 = vmatpush1.msra.mxu0 %v1394
  %1401 = vmatprep.subr.mxu0 0.0
  %1402 = vmatpush1.msra.mxu0 0.0
  %1403 = vmatprep.subr.mxu0 0.0
  %1404 = vmatpush1.msra.mxu0 0.0
  %1405 = vmatprep.subr.mxu0 0.0
  %1406 = vmatpush1.msra.mxu0 0.0
  %1407 = vmatprep.subr.mxu0 0.0
  %1408 = vmatpush1.msra.mxu0 0.0
  %1409 = vmatprep.subr.mxu0 0.0
  %1410 = vmatpush1.msra.mxu0 0.0
  %1411 = vmatprep.subr.mxu0 0.0
  %1412 = vmatpush1.msra.mxu0 0.0
  %1413 = vmatprep.subr.mxu0 0.0
  %1414 = vmatpush1.msra.mxu0 0.0
  %1415 = vmatprep.subr.mxu0 0.0
  %1416 = vmatpush1.msra.mxu0 0.0
  %1417 = vmatprep.subr.mxu0 0.0
  %1418 = vmatpush1.msra.mxu0 0.0
  %1419 = vmatprep.subr.mxu0 0.0
  %1420 = vmatpush1.msra.mxu0 0.0
  %1421 = vmatprep.subr.mxu0 0.0
  %1422 = vmatpush1.msra.mxu0 0.0
  %1423 = vmatprep.subr.mxu0 0.0
  %1424 = vmatpush1.msra.mxu0 0.0
  %1425 = vmatprep.subr.mxu0 0.0
  %1426 = vmatpush1.msra.mxu0 0.0
  %1427 = vmatprep.subr.mxu0 0.0
  %1428 = vmatpush1.msra.mxu0 0.0
  %1429 = vmatprep.subr.mxu0 0.0
  %1430 = vmatpush1.msra.mxu0 0.0
  %1431 = vmatprep.subr.mxu0 0.0
  %1432 = vmatpush1.msra.mxu0 0.0
  %1433 = vmatprep.subr.mxu0 0.0
  %1434 = vmatpush1.msra.mxu0 0.0
  %1435 = vmatprep.subr.mxu0 0.0
  %1436 = vmatpush1.msra.mxu0 0.0
  %1437 = vmatprep.subr.mxu0 0.0
  %1438 = vmatpush1.msra.mxu0 0.0
  %1439 = vmatprep.subr.mxu0 0.0
  %1440 = vmatpush1.msra.mxu0 0.0
  %1441 = vmatprep.subr.mxu0 0.0
  %1442 = vmatpush1.msra.mxu0 0.0
  %1443 = vmatprep.subr.mxu0 0.0
  %1444 = vmatpush1.msra.mxu0 0.0
  %1445 = vmatprep.subr.mxu0 0.0
  %1446 = vmatpush1.msra.mxu0 0.0
  %1447 = vmatprep.subr.mxu0 0.0
  %1448 = vmatpush1.msra.mxu0 0.0
  %1449 = vmatprep.subr.mxu0 0.0
  %1450 = vmatpush1.msra.mxu0 0.0
  %1451 = vmatprep.subr.mxu0 0.0
  %1452 = vmatpush1.msra.mxu0 0.0
  %1453 = vmatprep.subr.mxu0 0.0
  %1454 = vmatpush1.msra.mxu0 0.0
  %1455 = vmatprep.subr.mxu0 0.0
  %1456 = vmatpush1.msra.mxu0 0.0
  %1457 = vmatprep.subr.mxu0 0.0
  %1458 = vmatpush1.msra.mxu0 0.0
  %1459 = vmatprep.subr.mxu0 0.0
  %1460 = vmatpush1.msra.mxu0 0.0
  %1461 = vmatprep.subr.mxu0 0.0
  %1462 = vmatpush1.msra.mxu0 0.0
  %1463 = vmatprep.mubr.f32.mxu0 0.0
  %1464 = vmatmul.mubr.f32.gmra.mrb[0].mxu0 %v1397
  %v1465 = vpop.f32.mrb[0].mxu0
  %v1466 = vadd.f32 0.0, %v1465
  %v1467 = vpop.f32.mrb[0].mxu0
  %1468 = vdwg.mxu0
  %1471 = vrot.lane.b32.xlu0 %v726, 8
  %v1472 = vpop.permute.xlu0 %1471
  %1473 = vrot.lane.b32.xlu0 %v802, 8
  %v1474 = vpop.permute.xlu0 %1473
  %1479 = vrot.lane.b32.xlu0 %v1058, 16
  %v1480 = vpop.permute.xlu0 %1479
  %1481 = vrot.lane.b32.xlu0 %v1134, 16
  %v1482 = vpop.permute.xlu0 %1481
  %1487 = vrot.lane.b32.xlu0 %v1390, 24
  %v1488 = vpop.permute.xlu0 %1487
  %1489 = vrot.lane.b32.xlu0 %v1466, 24
  %v1490 = vpop.permute.xlu0 %1489
  %v1493 = vsel %vm147, %v394, %v1472
  %v1494 = vsel %vm147, %v470, %v1474
  %vm1495 = vcmask 130048
  %v1496 = vsel %vm1495, %v1493, %v1480
  %v1497 = vsel %vm1495, %v1494, %v1482
  %vm1498 = vcmask 195584
  %v1499 = vsel %vm1498, %v1496, %v1488
  %v1500 = vsel %vm1498, %v1497, %v1490
  %v1501 = vld [vmem:[%s3] sm:$0xff]
  %v1502 = vld [vmem:[%s3 + $0x8] sm:$0xff]
  %v1503 = vld [vmem:[%s3 + $0x10] sm:$0xff]
  %v1504 = vld [vmem:[%s3 + $0x18] sm:$0xff]
  %v1506 = vsel %vm33, %v1499, 0
  %v1509 = vsel %vm33, %v1500, 0
  %1511 = vmatprep.subr.mxu0 0.0
  %1512 = vmatpush1.msra.mxu0 %v1501
  %1513 = vmatprep.subr.mxu0 0.0
  %1514 = vmatpush1.msra.mxu0 %v1502
  %1515 = vmatprep.subr.mxu0 0.0
  %1516 = vmatpush1.msra.mxu0 %v1503
  %1517 = vmatprep.subr.mxu0 0.0
  %1518 = vmatpush1.msra.mxu0 %v1504
  %1519 = vmatprep.subr.mxu0 0.0
  %1520 = vmatpush1.msra.mxu0 0.0
  %1521 = vmatprep.subr.mxu0 0.0
  %1522 = vmatpush1.msra.mxu0 0.0
  %1523 = vmatprep.subr.mxu0 0.0
  %1524 = vmatpush1.msra.mxu0 0.0
  %1525 = vmatprep.subr.mxu0 0.0
  %1526 = vmatpush1.msra.mxu0 0.0
  %1527 = vmatprep.subr.mxu0 0.0
  %1528 = vmatpush1.msra.mxu0 0.0
  %1529 = vmatprep.subr.mxu0 0.0
  %1530 = vmatpush1.msra.mxu0 0.0
  %1531 = vmatprep.subr.mxu0 0.0
  %1532 = vmatpush1.msra.mxu0 0.0
  %1533 = vmatprep.subr.mxu0 0.0
  %1534 = vmatpush1.msra.mxu0 0.0
  %1535 = vmatprep.subr.mxu0 0.0
  %1536 = vmatpush1.msra.mxu0 0.0
  %1537 = vmatprep.subr.mxu0 0.0
  %1538 = vmatpush1.msra.mxu0 0.0
  %1539 = vmatprep.subr.mxu0 0.0
  %1540 = vmatpush1.msra.mxu0 0.0
  %1541 = vmatprep.subr.mxu0 0.0
  %1542 = vmatpush1.msra.mxu0 0.0
  %1543 = vmatprep.subr.mxu0 0.0
  %1544 = vmatpush1.msra.mxu0 0.0
  %1545 = vmatprep.subr.mxu0 0.0
  %1546 = vmatpush1.msra.mxu0 0.0
  %1547 = vmatprep.subr.mxu0 0.0
  %1548 = vmatpush1.msra.mxu0 0.0
  %1549 = vmatprep.subr.mxu0 0.0
  %1550 = vmatpush1.msra.mxu0 0.0
  %1551 = vmatprep.subr.mxu0 0.0
  %1552 = vmatpush1.msra.mxu0 0.0
  %1553 = vmatprep.subr.mxu0 0.0
  %1554 = vmatpush1.msra.mxu0 0.0
  %1555 = vmatprep.subr.mxu0 0.0
  %1556 = vmatpush1.msra.mxu0 0.0
  %1557 = vmatprep.subr.mxu0 0.0
  %1558 = vmatpush1.msra.mxu0 0.0
  %1559 = vmatprep.subr.mxu0 0.0
  %1560 = vmatpush1.msra.mxu0 0.0
  %1561 = vmatprep.subr.mxu0 0.0
  %1562 = vmatpush1.msra.mxu0 0.0
  %1563 = vmatprep.subr.mxu0 0.0
  %1564 = vmatpush1.msra.mxu0 0.0
  %1565 = vmatprep.subr.mxu0 0.0
  %1566 = vmatpush1.msra.mxu0 0.0
  %1567 = vmatprep.subr.mxu0 0.0
  %1568 = vmatpush1.msra.mxu0 0.0
  %1569 = vmatprep.subr.mxu0 0.0
  %1570 = vmatpush1.msra.mxu0 0.0
  %1571 = vmatprep.subr.mxu0 0.0
  %1572 = vmatpush1.msra.mxu0 0.0
  %1573 = vmatprep.subr.mxu0 0.0
  %1574 = vmatpush1.msra.mxu0 0.0
  %1575 = vmatprep.mubr.f32.mxu0 0.0
  %1576 = vmatmul.mubr.f32.gmra.mrb[0].mxu0 %v1506
  %v1577 = vpop.f32.mrb[0].mxu0
  %v1578 = vadd.f32 0.0, %v1577
  %v1579 = vpop.f32.mrb[0].mxu0
  %1580 = vmatprep.mubr.f32.mxu0 0.0
  %1581 = vmatmul.mubr.f32.gmra.mrb[0].mxu0 %v1509
  %v1582 = vpop.f32.mrb[0].mxu0
  %v1583 = vadd.f32 0.0, %v1582
  %v1584 = vpop.f32.mrb[0].mxu0
  %1585 = vdwg.mxu0
  %v1586 = vadd.f32 %v29, %v1578
  %v1587 = vadd.f32 %v30, %v1583
  %v1588 = vmul.f32 %v1586, %v1586
  %v1589 = vmul.f32 %v1587, %v1587
  %v1590 = vsel %vm33, %v1588, 0.0
  %1591 = vadd.xlane.f32.xlu0 %v1590
  %v1592 = vpop.xlane.xlu0 %1591
  %v1593 = vsel %vm33, %v1589, 0.0
  %1594 = vadd.xlane.f32.xlu0 %v1593
  %v1595 = vpop.xlane.xlu0 %1594
  %v1596 = vmul.f32 %v1592, %v40
  %v1597 = vmul.f32 %v1595, %v40
  %v1598 = vadd.f32 %v1596, 1e-06
  %v1599 = vadd.f32 %v1597, 1e-06
  %v1600 = vrsqrt.pop %v1598
  %v1601 = vrsqrt.pop %v1599
  %v1602 = vmul.f32 %v1586, %v1600
  %v1603 = vmul.f32 %v1587, %v1601
  %v1604 = vld [vmem:[%s4] sm:$0x1]
  %v1606 = vlaneseq
  %v1607 = vshrl.u32 %v1606, 7
  %v1608 = vsub.s32 0, %v1607
  %v1609 = vrot.slane %v1604, %v1608
  %v1611 = vmul.f32 %v1602, %v1609
  %v1612 = vmul.f32 %v1603, %v1609
  %v1613 = vld [vmem:[%s5] sm:$0xff]
  %v1614 = vld [vmem:[%s5 + $0x8] sm:$0xff]
  %v1615 = vld [vmem:[%s5 + $0x10] sm:$0xff]
  %v1616 = vld [vmem:[%s5 + $0x18] sm:$0xff]
  %v1618 = vsel %vm33, %v1611, 0
  %v1621 = vsel %vm33, %v1612, 0
  %1623 = vmatprep.subr.mxu0 0.0
  %1624 = vmatpush1.msra.mxu0 %v1613
  %1625 = vmatprep.subr.mxu0 0.0
  %1626 = vmatpush1.msra.mxu0 %v1614
  %1627 = vmatprep.subr.mxu0 0.0
  %1628 = vmatpush1.msra.mxu0 %v1615
  %1629 = vmatprep.subr.mxu0 0.0
  %1630 = vmatpush1.msra.mxu0 %v1616
  %1631 = vmatprep.subr.mxu0 0.0
  %1632 = vmatpush1.msra.mxu0 0.0
  %1633 = vmatprep.subr.mxu0 0.0
  %1634 = vmatpush1.msra.mxu0 0.0
  %1635 = vmatprep.subr.mxu0 0.0
  %1636 = vmatpush1.msra.mxu0 0.0
  %1637 = vmatprep.subr.mxu0 0.0
  %1638 = vmatpush1.msra.mxu0 0.0
  %1639 = vmatprep.subr.mxu0 0.0
  %1640 = vmatpush1.msra.mxu0 0.0
  %1641 = vmatprep.subr.mxu0 0.0
  %1642 = vmatpush1.msra.mxu0 0.0
  %1643 = vmatprep.subr.mxu0 0.0
  %1644 = vmatpush1.msra.mxu0 0.0
  %1645 = vmatprep.subr.mxu0 0.0
  %1646 = vmatpush1.msra.mxu0 0.0
  %1647 = vmatprep.subr.mxu0 0.0
  %1648 = vmatpush1.msra.mxu0 0.0
  %1649 = vmatprep.subr.mxu0 0.0
  %1650 = vmatpush1.msra.mxu0 0.0
  %1651 = vmatprep.subr.mxu0 0.0
  %1652 = vmatpush1.msra.mxu0 0.0
  %1653 = vmatprep.subr.mxu0 0.0
  %1654 = vmatpush1.msra.mxu0 0.0
  %1655 = vmatprep.subr.mxu0 0.0
  %1656 = vmatpush1.msra.mxu0 0.0
  %1657 = vmatprep.subr.mxu0 0.0
  %1658 = vmatpush1.msra.mxu0 0.0
  %1659 = vmatprep.subr.mxu0 0.0
  %1660 = vmatpush1.msra.mxu0 0.0
  %1661 = vmatprep.subr.mxu0 0.0
  %1662 = vmatpush1.msra.mxu0 0.0
  %1663 = vmatprep.subr.mxu0 0.0
  %1664 = vmatpush1.msra.mxu0 0.0
  %1665 = vmatprep.subr.mxu0 0.0
  %1666 = vmatpush1.msra.mxu0 0.0
  %1667 = vmatprep.subr.mxu0 0.0
  %1668 = vmatpush1.msra.mxu0 0.0
  %1669 = vmatprep.subr.mxu0 0.0
  %1670 = vmatpush1.msra.mxu0 0.0
  %1671 = vmatprep.subr.mxu0 0.0
  %1672 = vmatpush1.msra.mxu0 0.0
  %1673 = vmatprep.subr.mxu0 0.0
  %1674 = vmatpush1.msra.mxu0 0.0
  %1675 = vmatprep.subr.mxu0 0.0
  %1676 = vmatpush1.msra.mxu0 0.0
  %1677 = vmatprep.subr.mxu0 0.0
  %1678 = vmatpush1.msra.mxu0 0.0
  %1679 = vmatprep.subr.mxu0 0.0
  %1680 = vmatpush1.msra.mxu0 0.0
  %1681 = vmatprep.subr.mxu0 0.0
  %1682 = vmatpush1.msra.mxu0 0.0
  %1683 = vmatprep.subr.mxu0 0.0
  %1684 = vmatpush1.msra.mxu0 0.0
  %1685 = vmatprep.subr.mxu0 0.0
  %1686 = vmatpush1.msra.mxu0 0.0
  %1687 = vmatprep.mubr.f32.mxu0 0.0
  %1688 = vmatmul.mubr.f32.gmra.mrb[0].mxu0 %v1618
  %v1689 = vpop.f32.mrb[0].mxu0
  %v1690 = vadd.f32 0.0, %v1689
  %v1691 = vpop.f32.mrb[0].mxu0
  %1692 = vmatprep.mubr.f32.mxu0 0.0
  %1693 = vmatmul.mubr.f32.gmra.mrb[0].mxu0 %v1621
  %v1694 = vpop.f32.mrb[0].mxu0
  %v1695 = vadd.f32 0.0, %v1694
  %v1696 = vpop.f32.mrb[0].mxu0
  %1697 = vdwg.mxu0
  %v1698 = vmul.f32 %v1690, 0.5
  %v1699 = vmul.f32 %v1695, 0.5
  %v1700 = vmul.f32 %v1690, 0.044715
  %v1701 = vmul.f32 %v1695, 0.044715
  %v1702 = vmul.f32 %v1700, %v1690
  %v1703 = vmul.f32 %v1701, %v1695
  %v1704 = vmul.f32 %v1702, %v1690
  %v1705 = vmul.f32 %v1703, %v1695
  %v1706 = vadd.f32 %v1690, %v1704
  %v1707 = vadd.f32 %v1695, %v1705
  %v1708 = vmul.f32 %v1706, 0.7978846
  %v1709 = vmul.f32 %v1707, 0.7978846
  %v1710 = vtanh.pop %v1708
  %v1711 = vtanh.pop %v1709
  %v1712 = vadd.f32 %v1710, 1.0
  %v1713 = vadd.f32 %v1711, 1.0
  %v1714 = vmul.f32 %v1698, %v1712
  %v1715 = vmul.f32 %v1699, %v1713
  %1718 = vrot.lane.b32.xlu0 %v1690, 64
  %v1719 = vpop.permute.xlu0 %1718
  %1720 = vrot.lane.b32.xlu0 %v1695, 64
  %v1721 = vpop.permute.xlu0 %1720
  %v1724 = vmul.f32 %v1714, %v1719
  %v1725 = vmul.f32 %v1715, %v1721
  %v1726 = vld [vmem:[%s6] sm:$0xff]
  %v1727 = vld [vmem:[%s6 + $0x8] sm:$0xff]
  %v1728 = vld [vmem:[%s6 + $0x10] sm:$0xff]
  %v1729 = vld [vmem:[%s6 + $0x18] sm:$0xff]
  %v1730 = vld [vmem:[%s6 + $0x20] sm:$0xff]
  %v1731 = vld [vmem:[%s6 + $0x28] sm:$0xff]
  %v1732 = vld [vmem:[%s6 + $0x30] sm:$0xff]
  %v1733 = vld [vmem:[%s6 + $0x38] sm:$0xff]
  %vm1734 = vcmask 523264
  %v1736 = vsel %vm1734, %v1724, 0
  %v1739 = vsel %vm1734, %v1725, 0
  %1741 = vmatprep.subr.mxu0 0.0
  %1742 = vmatpush1.msra.mxu0 %v1726
  %1743 = vmatprep.subr.mxu0 0.0
  %1744 = vmatpush1.msra.mxu0 %v1727
  %1745 = vmatprep.subr.mxu0 0.0
  %1746 = vmatpush1.msra.mxu0 %v1728
  %1747 = vmatprep.subr.mxu0 0.0
  %1748 = vmatpush1.msra.mxu0 %v1729
  %1749 = vmatprep.subr.mxu0 0.0
  %1750 = vmatpush1.msra.mxu0 %v1730
  %1751 = vmatprep.subr.mxu0 0.0
  %1752 = vmatpush1.msra.mxu0 %v1731
  %1753 = vmatprep.subr.mxu0 0.0
  %1754 = vmatpush1.msra.mxu0 %v1732
  %1755 = vmatprep.subr.mxu0 0.0
  %1756 = vmatpush1.msra.mxu0 %v1733
  %1757 = vmatprep.subr.mxu0 0.0
  %1758 = vmatpush1.msra.mxu0 0.0
  %1759 = vmatprep.subr.mxu0 0.0
  %1760 = vmatpush1.msra.mxu0 0.0
  %1761 = vmatprep.subr.mxu0 0.0
  %1762 = vmatpush1.msra.mxu0 0.0
  %1763 = vmatprep.subr.mxu0 0.0
  %1764 = vmatpush1.msra.mxu0 0.0
  %1765 = vmatprep.subr.mxu0 0.0
  %1766 = vmatpush1.msra.mxu0 0.0
  %1767 = vmatprep.subr.mxu0 0.0
  %1768 = vmatpush1.msra.mxu0 0.0
  %1769 = vmatprep.subr.mxu0 0.0
  %1770 = vmatpush1.msra.mxu0 0.0
  %1771 = vmatprep.subr.mxu0 0.0
  %1772 = vmatpush1.msra.mxu0 0.0
  %1773 = vmatprep.subr.mxu0 0.0
  %1774 = vmatpush1.msra.mxu0 0.0
  %1775 = vmatprep.subr.mxu0 0.0
  %1776 = vmatpush1.msra.mxu0 0.0
  %1777 = vmatprep.subr.mxu0 0.0
  %1778 = vmatpush1.msra.mxu0 0.0
  %1779 = vmatprep.subr.mxu0 0.0
  %1780 = vmatpush1.msra.mxu0 0.0
  %1781 = vmatprep.subr.mxu0 0.0
  %1782 = vmatpush1.msra.mxu0 0.0
  %1783 = vmatprep.subr.mxu0 0.0
  %1784 = vmatpush1.msra.mxu0 0.0
  %1785 = vmatprep.subr.mxu0 0.0
  %1786 = vmatpush1.msra.mxu0 0.0
  %1787 = vmatprep.subr.mxu0 0.0
  %1788 = vmatpush1.msra.mxu0 0.0
  %1789 = vmatprep.subr.mxu0 0.0
  %1790 = vmatpush1.msra.mxu0 0.0
  %1791 = vmatprep.subr.mxu0 0.0
  %1792 = vmatpush1.msra.mxu0 0.0
  %1793 = vmatprep.subr.mxu0 0.0
  %1794 = vmatpush1.msra.mxu0 0.0
  %1795 = vmatprep.subr.mxu0 0.0
  %1796 = vmatpush1.msra.mxu0 0.0
  %1797 = vmatprep.subr.mxu0 0.0
  %1798 = vmatpush1.msra.mxu0 0.0
  %1799 = vmatprep.subr.mxu0 0.0
  %1800 = vmatpush1.msra.mxu0 0.0
  %1801 = vmatprep.subr.mxu0 0.0
  %1802 = vmatpush1.msra.mxu0 0.0
  %1803 = vmatprep.subr.mxu0 0.0
  %1804 = vmatpush1.msra.mxu0 0.0
  %1805 = vmatprep.mubr.f32.mxu0 0.0
  %1806 = vmatmul.mubr.f32.gmra.mrb[0].mxu0 %v1736
  %v1807 = vpop.f32.mrb[0].mxu0
  %v1808 = vadd.f32 0.0, %v1807
  %v1809 = vpop.f32.mrb[0].mxu0
  %1810 = vmatprep.mubr.f32.mxu0 0.0
  %1811 = vmatmul.mubr.f32.gmra.mrb[0].mxu0 %v1739
  %v1812 = vpop.f32.mrb[0].mxu0
  %v1813 = vadd.f32 0.0, %v1812
  %v1814 = vpop.f32.mrb[0].mxu0
  %1815 = vdwg.mxu0
  %v1816 = vadd.f32 %v1586, %v1808
  %v1817 = vadd.f32 %v1587, %v1813
  %1818 = vst.msk [vmem:[%s8] sm:$0xff] %vm33, %v1816
  %1819 = vst.msk [vmem:[%s8 + $0x8] sm:$0xff] %vm33, %v1817
  // Predicated region
  $region34: #{neuron_flux_t5_text_encoder_forward.3} parent=0 // pred_check
    _
  $region35: #{neuron_flux_t5_text_encoder_forward.3} parent=0 // pred_check_branch
    %1821 = sbr.rel (0) target = $region37
  $region36: #{neuron_flux_t5_text_encoder_forward.3} parent=0 // pred_region
    _
  $region37: #{neuron_flux_t5_text_encoder_forward.3} parent=0 // pred_fallthru
    _
  // Predicated region
  $region38: #{neuron_flux_t5_text_encoder_forward.3} parent=0 // pred_check
    _
  $region39: #{neuron_flux_t5_text_encoder_forward.3} parent=0 // pred_check_branch
    %1823 = sbr.rel (0) target = $region41
  $region40: #{neuron_flux_t5_text_encoder_forward.3} parent=0 // pred_region
    _
  $region41: #{neuron_flux_t5_text_encoder_forward.3} parent=0 // pred_fallthru
    _

</llo_original>
